<compile_context>
chip_gen: v6e
topology: v6e:2x2x1
jax: 0.10.0
libtpu: 0.0.40
codegen_flags: <defaults>
</compile_context>

<pallas_src>
import functools

import jax
import jax.numpy as jnp
import numpy as np
from jax import lax
from jax.experimental import pallas as pl
from jax.experimental.pallas import tpu as pltpu


def _round_up(x, m):
    return -(-x // m) * m


# ---------------------------------------------------------------------------
# Pallas kernel: slab DMA -> in-VMEM patch build -> bf16 MXU matmul -> bias+ReLU
# ---------------------------------------------------------------------------
def _deconv_kernel(a_hbm, w_ref, b_ref, o_ref, slab_ref, p_ref, sem,
                   *, ts, slab_w, deltas, cin_p):
    # a_hbm : (CinP, S_in)       bf16, HBM (pl.ANY)   planar, +1-padded input
    # w_ref : (8*Cout, 27*CinP)  bf16, VMEM resident  per-tap weights
    # b_ref : (8*Cout, 1)        f32,  VMEM resident  parity-replicated bias
    # o_ref : (8*Cout, ts)       f32                  lane-dense output tile
    # slab  : (CinP, slab_w)     bf16, VMEM scratch   input slab (tile + halo)
    # p_ref : (27*CinP, ts)      bf16, VMEM scratch   patch matrix
    i = pl.program_id(0)
    s0 = pl.multiple_of(i * ts, ts)

    cp = pltpu.make_async_copy(a_hbm.at[:, pl.ds(s0, slab_w)], slab_ref, sem)
    cp.start()
    cp.wait()

    # In-kernel "im2col": 27 static lane-offset views of the slab.
    for k, dk in enumerate(deltas):
        p_ref[k * cin_p:(k + 1) * cin_p, :] = slab_ref[:, dk:dk + ts]

    acc = jnp.dot(w_ref[...], p_ref[...], preferred_element_type=jnp.float32)
    o_ref[...] = jnp.maximum(acc + b_ref[...], 0.0).astype(o_ref.dtype)


# ---------------------------------------------------------------------------
# Deconv3D_Block.forward
# ---------------------------------------------------------------------------
def deconv3d_block_forward(x_ncdhw, weight, bias, kernel=4, stride=2, padding=1):
    # TODO(synk): generalize the parity decomposition beyond (kernel=4, stride=2, padding=1).
    assert kernel == 4 and stride == 2 and padding == 1
    N, Cin, D, H, W = x_ncdhw.shape
    assert weight.shape[0] == Cin and weight.shape[2:] == (4, 4, 4)
    Cout = weight.shape[1]
    OD, OH, OW = 2 * D, 2 * H, 2 * W
    PC = 8 * Cout                       # (2x2x2 output parity) x Cout rows
    CinP = _round_up(Cin, 16)           # keep bf16 sublane packing aligned

    # ---- planar, +1-halo padded, bf16 input: (CinP, N*(D+2)*(H+2)*(W+2)) ----
    xp = jnp.pad(x_ncdhw.astype(jnp.bfloat16),
                 ((0, 0), (0, CinP - Cin), (1, 1), (1, 1), (1, 1)))
    Dp, Hp, Wp = D + 2, H + 2, W + 2
    s_core = N * Dp * Hp * Wp
    a2 = jnp.transpose(xp, (1, 0, 2, 3, 4)).reshape(CinP, s_core)

    # Site-tile width (output lanes per grid step).
    if s_core >= 32768:
        ts = 2048
    elif s_core >= 8192:
        ts = 1024
    else:
        ts = 512
    n_tiles = -(-s_core // ts)
    s_out = n_tiles * ts

    # Tap offsets in flattened-site space; slab = tile + lane-rounded halo.
    # A shifted tap (a,b,c) of a valid site is a pure +delta column offset.
    p2, p1 = Hp * Wp, Wp
    deltas = tuple(a * p2 + b * p1 + c
                   for a in range(3) for b in range(3) for c in range(3))
    halo = _round_up(deltas[-1] + 1, 128)
    slab_w = ts + halo
    s_in = s_out + halo
    a2 = jnp.pad(a2, ((0, 0), (0, s_in - s_core)))

    # ---- per-tap weights, (8*Cout, 27*CinP) bf16 ----------------------------
    # y[2m+pd, 2h+ph, 2w+pw, co] += xpad[m+a, h+b, w+c, ci] * W[ci, co, kd, kh, kw]
    # with kd = 3 - 2a + pd, valid iff (a - pd) in {0, 1}  (same per axis).
    w = weight.astype(jnp.float32)                        # (Cin, Cout, 4, 4, 4)
    zeros = jnp.zeros((Cout, Cin), jnp.float32)
    taps = []
    for a in range(3):
        for b in range(3):
            for c in range(3):
                rows = []
                for pd in range(2):
                    for ph in range(2):
                        for pw in range(2):
                            ok = ((a - pd) in (0, 1) and (b - ph) in (0, 1)
                                  and (c - pw) in (0, 1))
                            if ok:
                                kd = 3 - 2 * a + pd
                                kh = 3 - 2 * b + ph
                                kw = 3 - 2 * c + pw
                                rows.append(w[:, :, kd, kh, kw].T)     # (Cout, Cin)
                            else:
                                rows.append(zeros)
                taps.append(jnp.concatenate(rows, axis=0))             # (PC, Cin)
    wall = jnp.stack(taps, axis=0)                                     # (27, PC, Cin)
    wall = jnp.pad(wall, ((0, 0), (0, 0), (0, CinP - Cin)))
    wbig = jnp.transpose(wall, (1, 0, 2)).reshape(PC, 27 * CinP)
    wbig = wbig.astype(jnp.bfloat16)

    bvec = jnp.tile(bias.astype(jnp.float32), 8).reshape(PC, 1)

    kern = functools.partial(_deconv_kernel, ts=ts, slab_w=slab_w,
                             deltas=deltas, cin_p=CinP)
    y = pl.pallas_call(
        kern,
        out_shape=jax.ShapeDtypeStruct((PC, s_out), jnp.float32),
        grid_spec=pltpu.PrefetchScalarGridSpec(
            num_scalar_prefetch=0,
            grid=(n_tiles,),
            in_specs=[
                pl.BlockSpec(memory_space=pl.ANY),                 # input stays in HBM
                pl.BlockSpec((PC, 27 * CinP), lambda i: (0, 0)),   # weights, resident
                pl.BlockSpec((PC, 1), lambda i: (0, 0)),           # bias, resident
            ],
            out_specs=pl.BlockSpec((PC, ts), lambda i: (0, i)),
            scratch_shapes=[
                pltpu.VMEM((CinP, slab_w), jnp.bfloat16),          # input slab
                pltpu.VMEM((27 * CinP, ts), jnp.bfloat16),         # patch matrix
                pltpu.SemaphoreType.DMA,                           # slab DMA semaphore
            ]),
        compiler_params=pltpu.CompilerParams(
            dimension_semantics=("parallel",)),
    )(a2, wbig, bvec)

    # ---- pixel-shuffle the (parity, channel) rows back into NCDHW ----------
    y = y[:, :s_core].reshape(2, 2, 2, Cout, N, Dp, Hp, Wp)
    y = y[:, :, :, :, :, :D, :H, :W]                      # keep valid anchor sites
    y = jnp.transpose(y, (4, 3, 5, 0, 6, 1, 7, 2))        # (N, Cout, D, 2, H, 2, W, 2)
    return y.reshape(N, Cout, OD, OH, OW)


# ---------------------------------------------------------------------------
# Independent reference (XLA conv path) for a numerical check.
# ---------------------------------------------------------------------------
def reference_forward(x_ncdhw, weight, bias, kernel=4, stride=2, padding=1):
    K, S, P = kernel, stride, padding
    x = jnp.transpose(x_ncdhw, (0, 2, 3, 4, 1)).astype(jnp.float32)
    w_flip = weight[:, :, ::-1, ::-1, ::-1]
    w_dhwio = jnp.transpose(w_flip, (2, 3, 4, 0, 1)).astype(jnp.float32)
    pad = K - 1 - P
    y = lax.conv_general_dilated(
        x, w_dhwio, window_strides=(1, 1, 1),
        padding=[(pad, pad)] * 3, lhs_dilation=(S, S, S),
        dimension_numbers=("NDHWC", "DHWIO", "NDHWC"))
    y = jnp.maximum(y + bias.astype(jnp.float32)[None, None, None, None, :], 0.0)
    return jnp.transpose(y, (0, 4, 1, 2, 3))


if __name__ == "__main__":
    key = jax.random.PRNGKey(0)
    k_x, k_w, k_b = jax.random.split(key, 3)

    # Deconv3D_Block(inp_feat=4, out_feat=8), input NCDHW
    N, Cin, Cout = 2, 4, 8
    D = H = W = 8
    x = jax.random.normal(k_x, (N, Cin, D, H, W), jnp.float32)
    # ConvTranspose3d weight shape: (in_channels, out_channels, kD, kH, kW)
    weight = jax.random.normal(k_w, (Cin, Cout, 4, 4, 4), jnp.float32) * 0.1
    bias = jax.random.normal(k_b, (Cout,), jnp.float32) * 0.1

    fwd = jax.jit(deconv3d_block_forward)
    out = jax.block_until_ready(fwd(x, weight, bias))
    assert out.shape == (N, Cout, 2 * D, 2 * H, 2 * W), out.shape

    ref = jax.block_until_ready(jax.jit(reference_forward)(x, weight, bias))
    np.testing.assert_allclose(np.asarray(out), np.asarray(ref),
                               rtol=2e-2, atol=2e-2)

    print("KERNEL_OK")
</pallas_src>

<mosaic_0001>
module attributes {stable_mosaic.version = 11 : i64} {
  func.func @_deconv_kernel(%arg0: i32, %arg1: memref<16x2304xbf16, #tpu.memory_space<any>>, %arg2: memref<64x432xbf16, #tpu.memory_space<vmem>>, %arg3: memref<64x1xf32, #tpu.memory_space<vmem>>, %arg4: memref<64x512xf32, #tpu.memory_space<vmem>>, %arg5: memref<16x768xbf16, #tpu.memory_space<vmem>>, %arg6: memref<432x512xbf16, #tpu.memory_space<vmem>>, %arg7: memref<!tpu.dma_semaphore, #tpu.memory_space<semaphore_mem>>) attributes {dimension_semantics = [#tpu.dimension_semantics<parallel>], iteration_bounds = array<i64: 4>, scalar_prefetch = 0 : i64, scratch_operands = 3 : i64, tpu.core_type = #tpu.core_type<tc>, window_params = [{}, {pipeline_mode = #tpu.pipeline_mode<synchronous>, transform_indices = @transform_1, window_bounds = array<i64: 64, 432>}, {pipeline_mode = #tpu.pipeline_mode<synchronous>, transform_indices = @transform_2, window_bounds = array<i64: 64, 1>}, {transform_indices = @transform_3, window_bounds = array<i64: 64, 512>}]} {
    %c512_i32 = arith.constant 512 : i32
    %0 = arith.muli %arg0, %c512_i32 : i32
    %1 = tpu.assume_multiple %0, 512 : i32
    %c0_i32 = arith.constant 0 : i32
    %2 = tpu.memref_slice %arg1[%c0_i32, %1] : memref<16x2304xbf16, #tpu.memory_space<any>> -> memref<16x768xbf16, #tpu.memory_space<any>>
    tpu.enqueue_dma source(%2 : memref<16x768xbf16, #tpu.memory_space<any>>) target(%arg5 : memref<16x768xbf16, #tpu.memory_space<vmem>>) target_semaphore(%arg7 : memref<!tpu.dma_semaphore, #tpu.memory_space<semaphore_mem>>)
    %c0_i32_0 = arith.constant 0 : i32
    %3 = tpu.memref_slice %arg1[%c0_i32_0, %1] : memref<16x2304xbf16, #tpu.memory_space<any>> -> memref<16x768xbf16, #tpu.memory_space<any>>
    tpu.wait_dma2 semaphore(%arg7 : memref<!tpu.dma_semaphore, #tpu.memory_space<semaphore_mem>>) src(%3 : memref<16x768xbf16, #tpu.memory_space<any>>) dst(%arg5 : memref<16x768xbf16, #tpu.memory_space<vmem>>)
    %c0 = arith.constant 0 : index
    %c0_1 = arith.constant 0 : index
    %4 = vector.load %arg5[%c0, %c0_1] : memref<16x768xbf16, #tpu.memory_space<vmem>>, vector<16x512xbf16>
    %c0_2 = arith.constant 0 : index
    %c0_3 = arith.constant 0 : index
    %5 = vector.load %arg6[%c0_2, %c0_3] : memref<432x512xbf16, #tpu.memory_space<vmem>>, vector<16x512xbf16>
    tpu.vector_store %arg6[%c0_2, %c0_3], %4 {strides = array<i32>} : memref<432x512xbf16, #tpu.memory_space<vmem>>, vector<16x512xbf16>,
    %c0_4 = arith.constant 0 : index
    %c1 = arith.constant 1 : index
    %6 = vector.load %arg5[%c0_4, %c1] : memref<16x768xbf16, #tpu.memory_space<vmem>>, vector<16x512xbf16>
    %c16 = arith.constant 16 : index
    %c0_5 = arith.constant 0 : index
    %7 = vector.load %arg6[%c16, %c0_5] : memref<432x512xbf16, #tpu.memory_space<vmem>>, vector<16x512xbf16>
    tpu.vector_store %arg6[%c16, %c0_5], %6 {strides = array<i32>} : memref<432x512xbf16, #tpu.memory_space<vmem>>, vector<16x512xbf16>,
    %c0_6 = arith.constant 0 : index
    %c2 = arith.constant 2 : index
    %8 = vector.load %arg5[%c0_6, %c2] : memref<16x768xbf16, #tpu.memory_space<vmem>>, vector<16x512xbf16>
    %c32 = arith.constant 32 : index
    %c0_7 = arith.constant 0 : index
    %9 = vector.load %arg6[%c32, %c0_7] : memref<432x512xbf16, #tpu.memory_space<vmem>>, vector<16x512xbf16>
    tpu.vector_store %arg6[%c32, %c0_7], %8 {strides = array<i32>} : memref<432x512xbf16, #tpu.memory_space<vmem>>, vector<16x512xbf16>,
    %c0_8 = arith.constant 0 : index
    %c10 = arith.constant 10 : index
    %10 = vector.load %arg5[%c0_8, %c10] : memref<16x768xbf16, #tpu.memory_space<vmem>>, vector<16x512xbf16>
    %c48 = arith.constant 48 : index
    %c0_9 = arith.constant 0 : index
    %11 = vector.load %arg6[%c48, %c0_9] : memref<432x512xbf16, #tpu.memory_space<vmem>>, vector<16x512xbf16>
    tpu.vector_store %arg6[%c48, %c0_9], %10 {strides = array<i32>} : memref<432x512xbf16, #tpu.memory_space<vmem>>, vector<16x512xbf16>,
    %c0_10 = arith.constant 0 : index
    %c11 = arith.constant 11 : index
    %12 = vector.load %arg5[%c0_10, %c11] : memref<16x768xbf16, #tpu.memory_space<vmem>>, vector<16x512xbf16>
    %c64 = arith.constant 64 : index
    %c0_11 = arith.constant 0 : index
    %13 = vector.load %arg6[%c64, %c0_11] : memref<432x512xbf16, #tpu.memory_space<vmem>>, vector<16x512xbf16>
    tpu.vector_store %arg6[%c64, %c0_11], %12 {strides = array<i32>} : memref<432x512xbf16, #tpu.memory_space<vmem>>, vector<16x512xbf16>,
    %c0_12 = arith.constant 0 : index
    %c12 = arith.constant 12 : index
    %14 = vector.load %arg5[%c0_12, %c12] : memref<16x768xbf16, #tpu.memory_space<vmem>>, vector<16x512xbf16>
    %c80 = arith.constant 80 : index
    %c0_13 = arith.constant 0 : index
    %15 = vector.load %arg6[%c80, %c0_13] : memref<432x512xbf16, #tpu.memory_space<vmem>>, vector<16x512xbf16>
    tpu.vector_store %arg6[%c80, %c0_13], %14 {strides = array<i32>} : memref<432x512xbf16, #tpu.memory_space<vmem>>, vector<16x512xbf16>,
    %c0_14 = arith.constant 0 : index
    %c20 = arith.constant 20 : index
    %16 = vector.load %arg5[%c0_14, %c20] : memref<16x768xbf16, #tpu.memory_space<vmem>>, vector<16x512xbf16>
    %c96 = arith.constant 96 : index
    %c0_15 = arith.constant 0 : index
    %17 = vector.load %arg6[%c96, %c0_15] : memref<432x512xbf16, #tpu.memory_space<vmem>>, vector<16x512xbf16>
    tpu.vector_store %arg6[%c96, %c0_15], %16 {strides = array<i32>} : memref<432x512xbf16, #tpu.memory_space<vmem>>, vector<16x512xbf16>,
    %c0_16 = arith.constant 0 : index
    %c21 = arith.constant 21 : index
    %18 = vector.load %arg5[%c0_16, %c21] : memref<16x768xbf16, #tpu.memory_space<vmem>>, vector<16x512xbf16>
    %c112 = arith.constant 112 : index
    %c0_17 = arith.constant 0 : index
    %19 = vector.load %arg6[%c112, %c0_17] : memref<432x512xbf16, #tpu.memory_space<vmem>>, vector<16x512xbf16>
    tpu.vector_store %arg6[%c112, %c0_17], %18 {strides = array<i32>} : memref<432x512xbf16, #tpu.memory_space<vmem>>, vector<16x512xbf16>,
    %c0_18 = arith.constant 0 : index
    %c22 = arith.constant 22 : index
    %20 = vector.load %arg5[%c0_18, %c22] : memref<16x768xbf16, #tpu.memory_space<vmem>>, vector<16x512xbf16>
    %c128 = arith.constant 128 : index
    %c0_19 = arith.constant 0 : index
    %21 = vector.load %arg6[%c128, %c0_19] : memref<432x512xbf16, #tpu.memory_space<vmem>>, vector<16x512xbf16>
    tpu.vector_store %arg6[%c128, %c0_19], %20 {strides = array<i32>} : memref<432x512xbf16, #tpu.memory_space<vmem>>, vector<16x512xbf16>,
    %c0_20 = arith.constant 0 : index
    %c100 = arith.constant 100 : index
    %22 = vector.load %arg5[%c0_20, %c100] : memref<16x768xbf16, #tpu.memory_space<vmem>>, vector<16x512xbf16>
    %c144 = arith.constant 144 : index
    %c0_21 = arith.constant 0 : index
    %23 = vector.load %arg6[%c144, %c0_21] : memref<432x512xbf16, #tpu.memory_space<vmem>>, vector<16x512xbf16>
    tpu.vector_store %arg6[%c144, %c0_21], %22 {strides = array<i32>} : memref<432x512xbf16, #tpu.memory_space<vmem>>, vector<16x512xbf16>,
    %c0_22 = arith.constant 0 : index
    %c101 = arith.constant 101 : index
    %24 = vector.load %arg5[%c0_22, %c101] : memref<16x768xbf16, #tpu.memory_space<vmem>>, vector<16x512xbf16>
    %c160 = arith.constant 160 : index
    %c0_23 = arith.constant 0 : index
    %25 = vector.load %arg6[%c160, %c0_23] : memref<432x512xbf16, #tpu.memory_space<vmem>>, vector<16x512xbf16>
    tpu.vector_store %arg6[%c160, %c0_23], %24 {strides = array<i32>} : memref<432x512xbf16, #tpu.memory_space<vmem>>, vector<16x512xbf16>,
    %c0_24 = arith.constant 0 : index
    %c102 = arith.constant 102 : index
    %26 = vector.load %arg5[%c0_24, %c102] : memref<16x768xbf16, #tpu.memory_space<vmem>>, vector<16x512xbf16>
    %c176 = arith.constant 176 : index
    %c0_25 = arith.constant 0 : index
    %27 = vector.load %arg6[%c176, %c0_25] : memref<432x512xbf16, #tpu.memory_space<vmem>>, vector<16x512xbf16>
    tpu.vector_store %arg6[%c176, %c0_25], %26 {strides = array<i32>} : memref<432x512xbf16, #tpu.memory_space<vmem>>, vector<16x512xbf16>,
    %c0_26 = arith.constant 0 : index
    %c110 = arith.constant 110 : index
    %28 = vector.load %arg5[%c0_26, %c110] : memref<16x768xbf16, #tpu.memory_space<vmem>>, vector<16x512xbf16>
    %c192 = arith.constant 192 : index
    %c0_27 = arith.constant 0 : index
    %29 = vector.load %arg6[%c192, %c0_27] : memref<432x512xbf16, #tpu.memory_space<vmem>>, vector<16x512xbf16>
    tpu.vector_store %arg6[%c192, %c0_27], %28 {strides = array<i32>} : memref<432x512xbf16, #tpu.memory_space<vmem>>, vector<16x512xbf16>,
    %c0_28 = arith.constant 0 : index
    %c111 = arith.constant 111 : index
    %30 = vector.load %arg5[%c0_28, %c111] : memref<16x768xbf16, #tpu.memory_space<vmem>>, vector<16x512xbf16>
    %c208 = arith.constant 208 : index
    %c0_29 = arith.constant 0 : index
    %31 = vector.load %arg6[%c208, %c0_29] : memref<432x512xbf16, #tpu.memory_space<vmem>>, vector<16x512xbf16>
    tpu.vector_store %arg6[%c208, %c0_29], %30 {strides = array<i32>} : memref<432x512xbf16, #tpu.memory_space<vmem>>, vector<16x512xbf16>,
    %c0_30 = arith.constant 0 : index
    %c112_31 = arith.constant 112 : index
    %32 = vector.load %arg5[%c0_30, %c112_31] : memref<16x768xbf16, #tpu.memory_space<vmem>>, vector<16x512xbf16>
    %c224 = arith.constant 224 : index
    %c0_32 = arith.constant 0 : index
    %33 = vector.load %arg6[%c224, %c0_32] : memref<432x512xbf16, #tpu.memory_space<vmem>>, vector<16x512xbf16>
    tpu.vector_store %arg6[%c224, %c0_32], %32 {strides = array<i32>} : memref<432x512xbf16, #tpu.memory_space<vmem>>, vector<16x512xbf16>,
    %c0_33 = arith.constant 0 : index
    %c120 = arith.constant 120 : index
    %34 = vector.load %arg5[%c0_33, %c120] : memref<16x768xbf16, #tpu.memory_space<vmem>>, vector<16x512xbf16>
    %c240 = arith.constant 240 : index
    %c0_34 = arith.constant 0 : index
    %35 = vector.load %arg6[%c240, %c0_34] : memref<432x512xbf16, #tpu.memory_space<vmem>>, vector<16x512xbf16>
    tpu.vector_store %arg6[%c240, %c0_34], %34 {strides = array<i32>} : memref<432x512xbf16, #tpu.memory_space<vmem>>, vector<16x512xbf16>,
    %c0_35 = arith.constant 0 : index
    %c121 = arith.constant 121 : index
    %36 = vector.load %arg5[%c0_35, %c121] : memref<16x768xbf16, #tpu.memory_space<vmem>>, vector<16x512xbf16>
    %c256 = arith.constant 256 : index
    %c0_36 = arith.constant 0 : index
    %37 = vector.load %arg6[%c256, %c0_36] : memref<432x512xbf16, #tpu.memory_space<vmem>>, vector<16x512xbf16>
    tpu.vector_store %arg6[%c256, %c0_36], %36 {strides = array<i32>} : memref<432x512xbf16, #tpu.memory_space<vmem>>, vector<16x512xbf16>,
    %c0_37 = arith.constant 0 : index
    %c122 = arith.constant 122 : index
    %38 = vector.load %arg5[%c0_37, %c122] : memref<16x768xbf16, #tpu.memory_space<vmem>>, vector<16x512xbf16>
    %c272 = arith.constant 272 : index
    %c0_38 = arith.constant 0 : index
    %39 = vector.load %arg6[%c272, %c0_38] : memref<432x512xbf16, #tpu.memory_space<vmem>>, vector<16x512xbf16>
    tpu.vector_store %arg6[%c272, %c0_38], %38 {strides = array<i32>} : memref<432x512xbf16, #tpu.memory_space<vmem>>, vector<16x512xbf16>,
    %c0_39 = arith.constant 0 : index
    %c200 = arith.constant 200 : index
    %40 = vector.load %arg5[%c0_39, %c200] : memref<16x768xbf16, #tpu.memory_space<vmem>>, vector<16x512xbf16>
    %c288 = arith.constant 288 : index
    %c0_40 = arith.constant 0 : index
    %41 = vector.load %arg6[%c288, %c0_40] : memref<432x512xbf16, #tpu.memory_space<vmem>>, vector<16x512xbf16>
    tpu.vector_store %arg6[%c288, %c0_40], %40 {strides = array<i32>} : memref<432x512xbf16, #tpu.memory_space<vmem>>, vector<16x512xbf16>,
    %c0_41 = arith.constant 0 : index
    %c201 = arith.constant 201 : index
    %42 = vector.load %arg5[%c0_41, %c201] : memref<16x768xbf16, #tpu.memory_space<vmem>>, vector<16x512xbf16>
    %c304 = arith.constant 304 : index
    %c0_42 = arith.constant 0 : index
    %43 = vector.load %arg6[%c304, %c0_42] : memref<432x512xbf16, #tpu.memory_space<vmem>>, vector<16x512xbf16>
    tpu.vector_store %arg6[%c304, %c0_42], %42 {strides = array<i32>} : memref<432x512xbf16, #tpu.memory_space<vmem>>, vector<16x512xbf16>,
    %c0_43 = arith.constant 0 : index
    %c202 = arith.constant 202 : index
    %44 = vector.load %arg5[%c0_43, %c202] : memref<16x768xbf16, #tpu.memory_space<vmem>>, vector<16x512xbf16>
    %c320 = arith.constant 320 : index
    %c0_44 = arith.constant 0 : index
    %45 = vector.load %arg6[%c320, %c0_44] : memref<432x512xbf16, #tpu.memory_space<vmem>>, vector<16x512xbf16>
    tpu.vector_store %arg6[%c320, %c0_44], %44 {strides = array<i32>} : memref<432x512xbf16, #tpu.memory_space<vmem>>, vector<16x512xbf16>,
    %c0_45 = arith.constant 0 : index
    %c210 = arith.constant 210 : index
    %46 = vector.load %arg5[%c0_45, %c210] : memref<16x768xbf16, #tpu.memory_space<vmem>>, vector<16x512xbf16>
    %c336 = arith.constant 336 : index
    %c0_46 = arith.constant 0 : index
    %47 = vector.load %arg6[%c336, %c0_46] : memref<432x512xbf16, #tpu.memory_space<vmem>>, vector<16x512xbf16>
    tpu.vector_store %arg6[%c336, %c0_46], %46 {strides = array<i32>} : memref<432x512xbf16, #tpu.memory_space<vmem>>, vector<16x512xbf16>,
    %c0_47 = arith.constant 0 : index
    %c211 = arith.constant 211 : index
    %48 = vector.load %arg5[%c0_47, %c211] : memref<16x768xbf16, #tpu.memory_space<vmem>>, vector<16x512xbf16>
    %c352 = arith.constant 352 : index
    %c0_48 = arith.constant 0 : index
    %49 = vector.load %arg6[%c352, %c0_48] : memref<432x512xbf16, #tpu.memory_space<vmem>>, vector<16x512xbf16>
    tpu.vector_store %arg6[%c352, %c0_48], %48 {strides = array<i32>} : memref<432x512xbf16, #tpu.memory_space<vmem>>, vector<16x512xbf16>,
    %c0_49 = arith.constant 0 : index
    %c212 = arith.constant 212 : index
    %50 = vector.load %arg5[%c0_49, %c212] : memref<16x768xbf16, #tpu.memory_space<vmem>>, vector<16x512xbf16>
    %c368 = arith.constant 368 : index
    %c0_50 = arith.constant 0 : index
    %51 = vector.load %arg6[%c368, %c0_50] : memref<432x512xbf16, #tpu.memory_space<vmem>>, vector<16x512xbf16>
    tpu.vector_store %arg6[%c368, %c0_50], %50 {strides = array<i32>} : memref<432x512xbf16, #tpu.memory_space<vmem>>, vector<16x512xbf16>,
    %c0_51 = arith.constant 0 : index
    %c220 = arith.constant 220 : index
    %52 = vector.load %arg5[%c0_51, %c220] : memref<16x768xbf16, #tpu.memory_space<vmem>>, vector<16x512xbf16>
    %c384 = arith.constant 384 : index
    %c0_52 = arith.constant 0 : index
    %53 = vector.load %arg6[%c384, %c0_52] : memref<432x512xbf16, #tpu.memory_space<vmem>>, vector<16x512xbf16>
    tpu.vector_store %arg6[%c384, %c0_52], %52 {strides = array<i32>} : memref<432x512xbf16, #tpu.memory_space<vmem>>, vector<16x512xbf16>,
    %c0_53 = arith.constant 0 : index
    %c221 = arith.constant 221 : index
    %54 = vector.load %arg5[%c0_53, %c221] : memref<16x768xbf16, #tpu.memory_space<vmem>>, vector<16x512xbf16>
    %c400 = arith.constant 400 : index
    %c0_54 = arith.constant 0 : index
    %55 = vector.load %arg6[%c400, %c0_54] : memref<432x512xbf16, #tpu.memory_space<vmem>>, vector<16x512xbf16>
    tpu.vector_store %arg6[%c400, %c0_54], %54 {strides = array<i32>} : memref<432x512xbf16, #tpu.memory_space<vmem>>, vector<16x512xbf16>,
    %c0_55 = arith.constant 0 : index
    %c222 = arith.constant 222 : index
    %56 = vector.load %arg5[%c0_55, %c222] : memref<16x768xbf16, #tpu.memory_space<vmem>>, vector<16x512xbf16>
    %c416 = arith.constant 416 : index
    %c0_56 = arith.constant 0 : index
    %57 = vector.load %arg6[%c416, %c0_56] : memref<432x512xbf16, #tpu.memory_space<vmem>>, vector<16x512xbf16>
    tpu.vector_store %arg6[%c416, %c0_56], %56 {strides = array<i32>} : memref<432x512xbf16, #tpu.memory_space<vmem>>, vector<16x512xbf16>,
    %c0_57 = arith.constant 0 : index
    %c0_58 = arith.constant 0 : index
    %58 = vector.load %arg2[%c0_57, %c0_58] : memref<64x432xbf16, #tpu.memory_space<vmem>>, vector<64x432xbf16>
    %c0_59 = arith.constant 0 : index
    %c0_60 = arith.constant 0 : index
    %59 = vector.load %arg6[%c0_59, %c0_60] : memref<432x512xbf16, #tpu.memory_space<vmem>>, vector<432x512xbf16>
    %cst = arith.constant dense<0.000000e+00> : vector<64x512xf32>
    %60 = tpu.matmul %58, %59, %cst {dimension_numbers = #tpu.dot_dimension_numbers<[1], [0], [0], [1], [0, 0, 1, 1], [], []>} : vector<64x432xbf16>, vector<432x512xbf16>, vector<64x512xf32> -> vector<64x512xf32>
    %c0_61 = arith.constant 0 : index
    %c0_62 = arith.constant 0 : index
    %61 = vector.load %arg3[%c0_61, %c0_62] : memref<64x1xf32, #tpu.memory_space<vmem>>, vector<64x1xf32>
    %62 = vector.broadcast %61 : vector<64x1xf32> to vector<64x512xf32>
    %63 = arith.addf %60, %62 : vector<64x512xf32>
    %cst_63 = arith.constant 0.000000e+00 : f32
    %64 = vector.broadcast %cst_63 : f32 to vector<64x512xf32>
    %65 = arith.maximumf %63, %64 : vector<64x512xf32>
    %c0_64 = arith.constant 0 : index
    %c0_65 = arith.constant 0 : index
    %66 = vector.load %arg4[%c0_64, %c0_65] : memref<64x512xf32, #tpu.memory_space<vmem>>, vector<64x512xf32>
    tpu.vector_store %arg4[%c0_64, %c0_65], %65 {strides = array<i32>} : memref<64x512xf32, #tpu.memory_space<vmem>>, vector<64x512xf32>,
    return
  }
  func.func @transform_1(%arg0: i32) -> (i32, i32) {
    %c0_i32 = arith.constant 0 : i32
    %c0_i32_0 = arith.constant 0 : i32
    %c0_i32_1 = arith.constant 0 : i32
    return %c0_i32, %c0_i32_0 : i32, i32
  }
  func.func @transform_2(%arg0: i32) -> (i32, i32) {
    %c0_i32 = arith.constant 0 : i32
    %c0_i32_0 = arith.constant 0 : i32
    %c0_i32_1 = arith.constant 0 : i32
    return %c0_i32, %c0_i32_0 : i32, i32
  }
  func.func @transform_3(%arg0: i32) -> (i32, i32) {
    %c0_i32 = arith.constant 0 : i32
    %c0_i32_0 = arith.constant 0 : i32
    return %c0_i32, %arg0 : i32, i32
  }
}

</mosaic_0001>

<llo_original>
// kernel: tile.8
$region0: #{tile.8}
  #allocation2 [shape = 's32[1]{0}', space=sflag, size = 0x4, scoped, tag = 'scoped memory for tile.8']
  %s0 = inlined_call_operand.hbm [shape: f32[8], index: 0, kind: input, shape index: {}]
  %s1 = inlined_call_operand.vmem [shape: f32[8,8], index: 1, kind: output, shape index: {}]
  $region1: #{tile.8} parent=0
    #allocation0 [shape = 'u8[512]{0}', space=vmem, size = 0x400, scoped, tag = 'operand span for operand 0']
    #allocation1 [shape = 's32[1]{0}', space=sflag, size = 0x4, scoped, tag = 'scoped memory for tile.8']
    %2 = vsyncpa [#allocation1], 0
    // Predicated region
    $region2: #{tile.8} parent=1 // pred_check
      _
    $region3: #{tile.8} parent=1 // pred_check_branch
      %4 = sbr.rel (0) target = $region5
    $region4: #{tile.8} parent=1 // pred_region
      %s6 = ssub.s32 16, 16
      %7 = vsyncadd [#allocation1], %s6
      %s9 = sshll.u32 [#allocation0], 4
      %s10 = int_to_ptr.vmem [resolvable:$true] %s9
      %12 = dma.hbm_to_vmem [thread:$0]  %s0, 16, %s10, [#allocation1]
    $region5: #{tile.8} parent=1 // pred_fallthru
      _
    // Predicated region
    $region6: #{tile.8} parent=1 // pred_check
      _
    $region7: #{tile.8} parent=1 // pred_check_branch
      %14 = sbr.rel (0) target = $region9
    $region8: #{tile.8} parent=1 // pred_region
      %15 = dma.done [#allocation1], 16
    $region9: #{tile.8} parent=1 // pred_fallthru
      _
    %v16 = vld [vmem:[#allocation0] ss:$0 sm:$0xff]
    %17 = vst [vmem:[%s1] sm:$0xff] %v16
    %18 = vsyncpa [#allocation1], 1

// kernel: tile.0
$region0: #{tile.0}
  %s0 = inlined_call_operand.vmem [shape: f32[8,8], index: 0, kind: input, shape index: {}]
  %s1 = inlined_call_operand.vmem [shape: f32[64,1], index: 1, kind: output, shape index: {}]
  %v2 = vld [vmem:[%s0] sm:$0xff]
  %vm3 = vcmask 7168
  %4 = vst.msk [vmem:[%s1] ss:$8 sm:$0xf] %vm3, %v2
  %5 = vst.msk [vmem:[%s1] ss:$8 sm:$0xf0] %vm3, %v2
  %v6 = vld [vmem:[%s0] sm:$0xff]
  %7 = vrot.lane.b32.xlu0 %v6, 127
  %v8 = vpop.permute.xlu0 %7
  %vm9 = vcmask 7168
  %s10 = scalar_lea.vmem %s1, 1
  %11 = vst.msk [vmem:[%s10] ss:$8 sm:$0xf] %vm9, %v8
  %s12 = scalar_lea.vmem %s1, 1
  %13 = vst.msk [vmem:[%s12] ss:$8 sm:$0xf0] %vm9, %v8
  %v14 = vld [vmem:[%s0] sm:$0xff]
  %15 = vrot.lane.b32.xlu0 %v14, 126
  %v16 = vpop.permute.xlu0 %15
  %vm17 = vcmask 7168
  %s18 = scalar_lea.vmem %s1, 2
  %19 = vst.msk [vmem:[%s18] ss:$8 sm:$0xf] %vm17, %v16
  %s20 = scalar_lea.vmem %s1, 2
  %21 = vst.msk [vmem:[%s20] ss:$8 sm:$0xf0] %vm17, %v16
  %v22 = vld [vmem:[%s0] sm:$0xff]
  %23 = vrot.lane.b32.xlu0 %v22, 125
  %v24 = vpop.permute.xlu0 %23
  %vm25 = vcmask 7168
  %s26 = scalar_lea.vmem %s1, 3
  %27 = vst.msk [vmem:[%s26] ss:$8 sm:$0xf] %vm25, %v24
  %s28 = scalar_lea.vmem %s1, 3
  %29 = vst.msk [vmem:[%s28] ss:$8 sm:$0xf0] %vm25, %v24
  %v30 = vld [vmem:[%s0] sm:$0xff]
  %31 = vrot.lane.b32.xlu0 %v30, 124
  %v32 = vpop.permute.xlu0 %31
  %vm33 = vcmask 7168
  %s34 = scalar_lea.vmem %s1, 4
  %35 = vst.msk [vmem:[%s34] ss:$8 sm:$0xf] %vm33, %v32
  %s36 = scalar_lea.vmem %s1, 4
  %37 = vst.msk [vmem:[%s36] ss:$8 sm:$0xf0] %vm33, %v32
  %v38 = vld [vmem:[%s0] sm:$0xff]
  %39 = vrot.lane.b32.xlu0 %v38, 123
  %v40 = vpop.permute.xlu0 %39
  %vm41 = vcmask 7168
  %s42 = scalar_lea.vmem %s1, 5
  %43 = vst.msk [vmem:[%s42] ss:$8 sm:$0xf] %vm41, %v40
  %s44 = scalar_lea.vmem %s1, 5
  %45 = vst.msk [vmem:[%s44] ss:$8 sm:$0xf0] %vm41, %v40
  %v46 = vld [vmem:[%s0] sm:$0xff]
  %47 = vrot.lane.b32.xlu0 %v46, 122
  %v48 = vpop.permute.xlu0 %47
  %vm49 = vcmask 7168
  %s50 = scalar_lea.vmem %s1, 6
  %51 = vst.msk [vmem:[%s50] ss:$8 sm:$0xf] %vm49, %v48
  %s52 = scalar_lea.vmem %s1, 6
  %53 = vst.msk [vmem:[%s52] ss:$8 sm:$0xf0] %vm49, %v48
  %v54 = vld [vmem:[%s0] sm:$0xff]
  %55 = vrot.lane.b32.xlu0 %v54, 121
  %v56 = vpop.permute.xlu0 %55
  %vm57 = vcmask 7168
  %s58 = scalar_lea.vmem %s1, 7
  %59 = vst.msk [vmem:[%s58] ss:$8 sm:$0xf] %vm57, %v56
  %s60 = scalar_lea.vmem %s1, 7
  %61 = vst.msk [vmem:[%s60] ss:$8 sm:$0xf0] %vm57, %v56

// kernel: deconv3d_block_forward.1
$region0: #{deconv3d_block_forward.1}
  #allocation0 [shape = 'u32[]', space=smem, size = 0x4, offset = 0x4, fixed_abs, tag = 'smem constant byte address 0x4 - core index']
  #allocation1 [shape = 'u32[144,128]{1,0:T(1,128)}', space=vmem, size = 0x12000, scoped, tag = 'internal scratch']
  #allocation2 [shape = 'bf16[16,768]{1,0:T(8,128)(2,1)}', space=vmem, size = 0x6000, scoped, tag = 'scratch operand']
  #allocation3 [shape = 'bf16[432,512]{1,0:T(8,128)(2,1)}', space=vmem, size = 0x6c000, scoped, tag = 'scratch operand']
  #allocation4 [shape = 's32[1]{0}', space=sflag, size = 0x4, scoped, tag = 'scratch operand']
  #allocation6 [shape = 's32[]', space=sflag, size = 0x4, offset = 0, fixed_abs, tag = 'sflag constant byte address 0x0 - dummy sync flag']
  %s0 = inlined_call_operand.vmem [shape: bf16[16,2304], index: 0, kind: input, shape index: {}]
  %s1 = inlined_call_operand.vmem [shape: bf16[64,432], index: 1, kind: input, shape index: {}]
  %s2 = inlined_call_operand.vmem [shape: f32[64,1], index: 2, kind: input, shape index: {}]
  %s3 = inlined_call_operand.vmem [shape: f32[64,2048], index: 3, kind: output, shape index: {}]
  %s4 = sld [smem:[#allocation0]]
  $region94: #{deconv3d_block_forward.1} parent=0
    _
  %s6 = ssub.s32 1, %s4
  %s7 = scalar_select 0, %s6, %s4
  $region1: #{deconv3d_block_forward.1} parent=0
    #allocation5 [shape = 'u8[262144]{0}', space=vmem, size = 0x40000, scoped, tag = 'output window, operand 0']
    loop: start=0, step=1, limit=6
    $region2: #{deconv3d_block_forward.1} parent=1 // loop_pre_header
      _
    $region3: #{deconv3d_block_forward.1} parent=1 // loop_header
      %s9 = sphi 0, %s13
      %p10 = scmp.ge.s32.totalorder %s9, 6
      %s17 = sphi 0, %s17
      %s19 = sphi 0, %s17
      %s20 = sphi 0, %s19
      %s34 = sphi 0, %s20
      %s38 = sphi 0, %s38
      %s40 = sphi 0, %s38
      %s41 = sphi 0, %s40
      %s55 = sphi 0, %s41
      %s61 = sphi 0, %s63
      %s64 = sphi 0, %s61
      %s65 = sphi 0, %s64
      %s81 = sphi 0, %s65
    $region4: #{deconv3d_block_forward.1} parent=1 // loop_header_branch
      %12 = sbr.rel (%p10) target = $region8
    $region5: #{deconv3d_block_forward.1} parent=1 // loop_body
      %s14 = ssub.s32 %s9, 1
      %s15 = ssub.s32 %s9, 2
      %s16 = sadd.s32 %s9, 1
      %s18 = sadd.s32 %s17, 1
      %p21 = scmp.eq.s32.totalorder %s9, 3
      %p22 = scmp.ne.s32.totalorder %s17, %s19
      %p23 = scmp.eq.s32.totalorder %s9, 0
      %p24 = por %p22, %p23
      %p25 = scmp.ne.s32.totalorder %s17, %s19
      %p26 = scmp.eq.s32.totalorder %s14, 3
      %p27 = por %p25, %p26
      %p28 = scmp.ne.s32.totalorder %s19, %s20
      %p29 = scmp.eq.s32.totalorder %s14, 0
      %p30 = por %p28, %p29
      %p31 = scmp.ne.s32.totalorder %s19, %s20
      %p32 = scmp.eq.s32.totalorder %s15, 3
      %p33 = por %p31, %p32
      %p35 = scmp.ne.s32.totalorder %s20, %s34
      %p36 = scmp.eq.s32.totalorder %s15, 0
      %p37 = por %p35, %p36
      %s39 = sadd.s32 %s38, 1
      %p42 = scmp.eq.s32.totalorder %s9, 3
      %p43 = scmp.ne.s32.totalorder %s38, %s40
      %p44 = scmp.eq.s32.totalorder %s9, 0
      %p45 = por %p43, %p44
      %p46 = scmp.ne.s32.totalorder %s38, %s40
      %p47 = scmp.eq.s32.totalorder %s14, 3
      %p48 = por %p46, %p47
      %p49 = scmp.ne.s32.totalorder %s40, %s41
      %p50 = scmp.eq.s32.totalorder %s14, 0
      %p51 = por %p49, %p50
      %p52 = scmp.ne.s32.totalorder %s40, %s41
      %p53 = scmp.eq.s32.totalorder %s15, 3
      %p54 = por %p52, %p53
      %p56 = scmp.ne.s32.totalorder %s41, %s55
      %p57 = scmp.eq.s32.totalorder %s15, 0
      %p58 = por %p56, %p57
      %s59 = ssub.s32 %s9, %s16
      %p60 = scmp.eq.s32.totalorder %s59, 0
      %s62 = sadd.s32 %s61, 1
      %s63 = scalar_select %p60, %s61, %s62
      %p66 = pneg %p60
      %p67 = scmp.eq.s32.totalorder %s9, 3
      %p68 = por %p66, %p67
      %p69 = scmp.ne.s32.totalorder %s61, %s64
      %p70 = scmp.eq.s32.totalorder %s9, 0
      %p71 = por %p69, %p70
      %p72 = scmp.ne.s32.totalorder %s61, %s64
      %p73 = scmp.eq.s32.totalorder %s14, 3
      %p74 = por %p72, %p73
      %p75 = scmp.ne.s32.totalorder %s64, %s65
      %p76 = scmp.eq.s32.totalorder %s14, 0
      %p77 = por %p75, %p76
      %p78 = scmp.ne.s32.totalorder %s64, %s65
      %p79 = scmp.eq.s32.totalorder %s15, 3
      %p80 = por %p78, %p79
      %p82 = scmp.ne.s32.totalorder %s65, %s81
      %p83 = scmp.eq.s32.totalorder %s15, 0
      %p84 = por %p82, %p83
      %p85 = scmp.le.s32.totalorder 1, %s9
      %p86 = scmp.lt.s32.totalorder %s9, 5
      %p87 = pnand %p85, %p86
      %p88 = pneg %p87
      // Predicated region
      $region9: #{deconv3d_block_forward.1} parent=5 // pred_check
        _
      $region10: #{deconv3d_block_forward.1} parent=5 // pred_check_branch
        %90 = sbr.rel (%p87) target = $region12
      $region11: #{deconv3d_block_forward.1} parent=5 // pred_region
        %s91 = ssub.s32 %s9, 1
        // Predicated region
        $region13: #{deconv3d_block_forward.1} parent=11 // pred_check
          %p92 = pneg %p30
        $region14: #{deconv3d_block_forward.1} parent=11 // pred_check_branch
          %94 = sbr.rel (%p92) target = $region16
        $region15: #{deconv3d_block_forward.1} parent=11 // pred_region
          _
        $region16: #{deconv3d_block_forward.1} parent=11 // pred_fallthru
          _
        // Predicated region
        $region17: #{deconv3d_block_forward.1} parent=11 // pred_check
          %p95 = pneg %p51
        $region18: #{deconv3d_block_forward.1} parent=11 // pred_check_branch
          %97 = sbr.rel (%p95) target = $region20
        $region19: #{deconv3d_block_forward.1} parent=11 // pred_region
          _
        $region20: #{deconv3d_block_forward.1} parent=11 // pred_fallthru
          _
      $region12: #{deconv3d_block_forward.1} parent=5 // pred_fallthru
        _
      %p98 = scmp.lt.s32.totalorder %s9, 4
      // Predicated region
      $region21: #{deconv3d_block_forward.1} parent=5 // pred_check
        %p99 = pneg %p98
      $region22: #{deconv3d_block_forward.1} parent=5 // pred_check_branch
        %101 = sbr.rel (%p99) target = $region24
      $region23: #{deconv3d_block_forward.1} parent=5 // pred_region
        _
      $region24: #{deconv3d_block_forward.1} parent=5 // pred_fallthru
        _
      %p102 = scmp.le.s32.totalorder 1, %s9
      %p103 = scmp.lt.s32.totalorder %s9, 5
      %p104 = pnand %p102, %p103
      %p105 = pneg %p104
      // Predicated region
      $region25: #{deconv3d_block_forward.1} parent=5 // pred_check
        _
      $region26: #{deconv3d_block_forward.1} parent=5 // pred_check_branch
        %107 = sbr.rel (%p104) target = $region28
      $region27: #{deconv3d_block_forward.1} parent=5 // pred_region
        %s108 = ssub.s32 %s9, 1
        %p109 = pneg %p30
        %p110 = pneg %p27
        %p111 = pneg %p51
        %p112 = pneg %p48
        %p113 = pneg %p77
        %p114 = pneg %p74
        %s115 = sand.u32 %s64, 1
        %s116 = sand.u32 %s64, 1
        %s117 = smul.addr %s116, 256
        %s118 = scalar_lea.vmem [#allocation5], %s117
        %s119 = smul.u32 4, %s14
        %s121 = smul.u32 %s14, 512
        %s122 = sshra.s32 %s121, 7
        %s123 = sand.u32 %s121, 127
        %s124 = smul.addr %s122, 4
        %s125 = scalar_lea.vmem %s0, %s124
        %p127 = scmp.lt.u32.totalorder 24, 8
        %p128 = pneg %p127
        // Predicated region
        $region29: #{deconv3d_block_forward.1} parent=27 // pred_check
          _
        $region30: #{deconv3d_block_forward.1} parent=27 // pred_check_branch
          %130 = sbr.rel (%p127) target = $region32
        $region31: #{deconv3d_block_forward.1} parent=27 // pred_region
          %s148 = sand.u32 24, 7
          %p149 = scmp.eq.s32.totalorder %s148, 0
          // Predicated region
          $region44: #{deconv3d_block_forward.1} parent=31 // pred_check
            %p150 = pneg %p149
          $region45: #{deconv3d_block_forward.1} parent=31 // pred_check_branch
            %152 = sbr.rel (%p150) target = $region47
          $region46: #{deconv3d_block_forward.1} parent=31 // pred_region
            loop: start=0, step=1, limit=1
            $region48: #{deconv3d_block_forward.1} parent=46 // loop_pre_header
              _
            $region49: #{deconv3d_block_forward.1} parent=46 // loop_header
              %s154 = sphi 0, %s158
              %p155 = scmp.ge.s32.totalorder %s154, 1
              %s159 = sphi %s125, %s125
              %s160 = sphi [#allocation2], [#allocation2]
            $region50: #{deconv3d_block_forward.1} parent=46 // loop_header_branch
              %157 = sbr.rel (%p155) target = $region54
            $region51: #{deconv3d_block_forward.1} parent=46 // loop_body
              %v161 = vld [vmem:[%s159] sm:$0xff]
              %162 = vst [vmem:[%s160] sm:$0xff] %v161
              %v163 = vld [vmem:[%s159 + $0x8] sm:$0xff]
              %164 = vst [vmem:[%s160 + $0x8] sm:$0xff] %v163
              %v165 = vld [vmem:[%s159 + $0x10] sm:$0xff]
              %166 = vst [vmem:[%s160 + $0x10] sm:$0xff] %v165
              %v167 = vld [vmem:[%s159 + $0x48] sm:$0xff]
              %168 = vst [vmem:[%s160 + $0x18] sm:$0xff] %v167
              %v169 = vld [vmem:[%s159 + $0x50] sm:$0xff]
              %170 = vst [vmem:[%s160 + $0x20] sm:$0xff] %v169
              %v171 = vld [vmem:[%s159 + $0x58] sm:$0xff]
              %172 = vst [vmem:[%s160 + $0x28] sm:$0xff] %v171
            $region52: #{deconv3d_block_forward.1} parent=46 // loop_footer
              %s158 = sadd.s32 1, %s154
            $region53: #{deconv3d_block_forward.1} parent=46 // loop_footer_branch
              %153 = sbr.rel target = $region49
            $region54: #{deconv3d_block_forward.1} parent=46 // loop_exit
              _
          $region47: #{deconv3d_block_forward.1} parent=31 // pred_fallthru
            _
          %p173 = pneg %p149
          // Predicated region
          $region55: #{deconv3d_block_forward.1} parent=31 // pred_check
            _
          $region56: #{deconv3d_block_forward.1} parent=31 // pred_check_branch
            %175 = sbr.rel (%p149) target = $region58
          $region57: #{deconv3d_block_forward.1} parent=31 // pred_region
            %s176 = sand.u32 24, 7
          $region58: #{deconv3d_block_forward.1} parent=31 // pred_fallthru
            _
        $region32: #{deconv3d_block_forward.1} parent=27 // pred_fallthru
          _
        // Predicated region
        $region33: #{deconv3d_block_forward.1} parent=27 // pred_check
          %p131 = pneg %p127
        $region34: #{deconv3d_block_forward.1} parent=27 // pred_check_branch
          %133 = sbr.rel (%p131) target = $region36
        $region35: #{deconv3d_block_forward.1} parent=27 // pred_region
          %s134 = sshll.u32 1, 24
          %s135 = ssub.s32 %s134, 1
          loop: start=0, step=1, limit=1
          $region37: #{deconv3d_block_forward.1} parent=35 // loop_pre_header
            _
          $region38: #{deconv3d_block_forward.1} parent=35 // loop_header
            %s137 = sphi 0, %s141
            %p138 = scmp.ge.s32.totalorder %s137, 1
            %s142 = sphi %s125, %s125
            %s143 = sphi [#allocation2], [#allocation2]
          $region39: #{deconv3d_block_forward.1} parent=35 // loop_header_branch
            %140 = sbr.rel (%p138) target = $region43
          $region40: #{deconv3d_block_forward.1} parent=35 // loop_body
            %v144 = vld [vmem:[%s142] sm:%s135]
            %145 = vst [vmem:[%s143] sm:%s135] %v144
            %v146 = vld [vmem:[%s142 + $0x48] sm:%s135]
            %147 = vst [vmem:[%s143 + $0x18] sm:%s135] %v146
          $region41: #{deconv3d_block_forward.1} parent=35 // loop_footer
            %s141 = sadd.s32 1, %s137
          $region42: #{deconv3d_block_forward.1} parent=35 // loop_footer_branch
            %136 = sbr.rel target = $region38
          $region43: #{deconv3d_block_forward.1} parent=35 // loop_exit
            _
        $region36: #{deconv3d_block_forward.1} parent=27 // pred_fallthru
          _
        // Predicated region
        $region59: #{deconv3d_block_forward.1} parent=27 // pred_check
          _
        $region60: #{deconv3d_block_forward.1} parent=27 // pred_check_branch
          %179 = sbr.rel (0) target = $region62
        $region61: #{deconv3d_block_forward.1} parent=27 // pred_region
          %180 = vsyncadd [#allocation4], 768
        $region62: #{deconv3d_block_forward.1} parent=27 // pred_fallthru
          _
        %s181 = smul.u32 4, 2
        %s182 = smul.u32 %s181, 6
        %s183 = sshll.u32 %s182, 4
        %184 = dma.done [#allocation4], %s183
        %v185 = vld [vmem:[#allocation2] sm:$0xff]
        %v186 = vld [vmem:[#allocation2 + $0x8] sm:$0xff]
        %v187 = vld [vmem:[#allocation2 + $0x18] sm:$0xff]
        %v188 = vld [vmem:[#allocation2 + $0x20] sm:$0xff]
        %189 = vst [vmem:[#allocation3] sm:$0xff] %v185
        %190 = vst [vmem:[#allocation3 + $0x8] sm:$0xff] %v186
        %191 = vst [vmem:[#allocation3 + $0x10] sm:$0xff] %v187
        %192 = vst [vmem:[#allocation3 + $0x18] sm:$0xff] %v188
        %v193 = vld [vmem:[#allocation2] sm:$0xff]
        %v194 = vld [vmem:[#allocation2 + $0x8] sm:$0xff]
        %v195 = vld [vmem:[#allocation2 + $0x10] sm:$0xf]
        %v196 = vld [vmem:[#allocation2 + $0x18] sm:$0xff]
        %v197 = vld [vmem:[#allocation2 + $0x20] sm:$0xff]
        %v198 = vld [vmem:[#allocation2 + $0x28] sm:$0xf]
        %205 = vrot.lane.b32.xlu0 %v193, 127
        %v206 = vpop.permute.xlu0 %205
        %207 = vrot.lane.b32.xlu0 %v194, 127
        %v208 = vpop.permute.xlu0 %207
        %209 = vrot.lane.b32.xlu0 %v195, 127
        %v210 = vpop.permute.xlu0 %209
        %211 = vrot.lane.b32.xlu0 %v196, 127
        %v212 = vpop.permute.xlu0 %211
        %213 = vrot.lane.b32.xlu0 %v197, 127
        %v214 = vpop.permute.xlu0 %213
        %215 = vrot.lane.b32.xlu0 %v198, 127
        %v216 = vpop.permute.xlu0 %215
        %v217 = vrot.slane %v206, 4
        %v218 = vrot.slane %v208, 4
        %v219 = vrot.slane %v210, 4
        %v220 = vrot.slane %v212, 4
        %v221 = vrot.slane %v214, 4
        %v222 = vrot.slane %v216, 4
        %vm223 = vcmask 1043456
        %v224 = vsel %vm223, %v217, %v218
        %vm225 = vcmask 1039360
        %v226 = vsel %vm225, %v206, %v224
        %v227 = vsel %vm223, %v218, %v219
        %v228 = vsel %vm225, %v208, %v227
        %v229 = vsel %vm223, %v220, %v221
        %v230 = vsel %vm225, %v212, %v229
        %v231 = vsel %vm223, %v221, %v222
        %v232 = vsel %vm225, %v214, %v231
        %237 = vst [vmem:[#allocation3 + $0x20] sm:$0xff] %v226
        %238 = vst [vmem:[#allocation3 + $0x28] sm:$0xff] %v228
        %239 = vst [vmem:[#allocation3 + $0x30] sm:$0xff] %v230
        %240 = vst [vmem:[#allocation3 + $0x38] sm:$0xff] %v232
        %v241 = vld [vmem:[#allocation2] sm:$0xff]
        %v242 = vld [vmem:[#allocation2 + $0x8] sm:$0xff]
        %v243 = vld [vmem:[#allocation2 + $0x10] sm:$0xf]
        %v244 = vld [vmem:[#allocation2 + $0x18] sm:$0xff]
        %v245 = vld [vmem:[#allocation2 + $0x20] sm:$0xff]
        %v246 = vld [vmem:[#allocation2 + $0x28] sm:$0xf]
        %253 = vrot.lane.b32.xlu0 %v241, 126
        %v254 = vpop.permute.xlu0 %253
        %255 = vrot.lane.b32.xlu0 %v242, 126
        %v256 = vpop.permute.xlu0 %255
        %257 = vrot.lane.b32.xlu0 %v243, 126
        %v258 = vpop.permute.xlu0 %257
        %259 = vrot.lane.b32.xlu0 %v244, 126
        %v260 = vpop.permute.xlu0 %259
        %261 = vrot.lane.b32.xlu0 %v245, 126
        %v262 = vpop.permute.xlu0 %261
        %263 = vrot.lane.b32.xlu0 %v246, 126
        %v264 = vpop.permute.xlu0 %263
        %v265 = vrot.slane %v254, 4
        %v266 = vrot.slane %v256, 4
        %v267 = vrot.slane %v258, 4
        %v268 = vrot.slane %v260, 4
        %v269 = vrot.slane %v262, 4
        %v270 = vrot.slane %v264, 4
        %v271 = vsel %vm223, %v265, %v266
        %vm272 = vcmask 1031168
        %v273 = vsel %vm272, %v254, %v271
        %v274 = vsel %vm223, %v266, %v267
        %v275 = vsel %vm272, %v256, %v274
        %v276 = vsel %vm223, %v268, %v269
        %v277 = vsel %vm272, %v260, %v276
        %v278 = vsel %vm223, %v269, %v270
        %v279 = vsel %vm272, %v262, %v278
        %284 = vst [vmem:[#allocation3 + $0x40] sm:$0xff] %v273
        %285 = vst [vmem:[#allocation3 + $0x48] sm:$0xff] %v275
        %286 = vst [vmem:[#allocation3 + $0x50] sm:$0xff] %v277
        %287 = vst [vmem:[#allocation3 + $0x58] sm:$0xff] %v279
        %v288 = vld [vmem:[#allocation2] sm:$0xff]
        %v289 = vld [vmem:[#allocation2 + $0x8] sm:$0xff]
        %v290 = vld [vmem:[#allocation2 + $0x10] sm:$0xf]
        %v291 = vld [vmem:[#allocation2 + $0x18] sm:$0xff]
        %v292 = vld [vmem:[#allocation2 + $0x20] sm:$0xff]
        %v293 = vld [vmem:[#allocation2 + $0x28] sm:$0xf]
        %300 = vrot.lane.b32.xlu0 %v288, 118
        %v301 = vpop.permute.xlu0 %300
        %302 = vrot.lane.b32.xlu0 %v289, 118
        %v303 = vpop.permute.xlu0 %302
        %304 = vrot.lane.b32.xlu0 %v290, 118
        %v305 = vpop.permute.xlu0 %304
        %306 = vrot.lane.b32.xlu0 %v291, 118
        %v307 = vpop.permute.xlu0 %306
        %308 = vrot.lane.b32.xlu0 %v292, 118
        %v309 = vpop.permute.xlu0 %308
        %310 = vrot.lane.b32.xlu0 %v293, 118
        %v311 = vpop.permute.xlu0 %310
        %v312 = vrot.slane %v301, 4
        %v313 = vrot.slane %v303, 4
        %v314 = vrot.slane %v305, 4
        %v315 = vrot.slane %v307, 4
        %v316 = vrot.slane %v309, 4
        %v317 = vrot.slane %v311, 4
        %v318 = vsel %vm223, %v312, %v313
        %vm319 = vcmask 965632
        %v320 = vsel %vm319, %v301, %v318
        %v321 = vsel %vm223, %v313, %v314
        %v322 = vsel %vm319, %v303, %v321
        %v323 = vsel %vm223, %v315, %v316
        %v324 = vsel %vm319, %v307, %v323
        %v325 = vsel %vm223, %v316, %v317
        %v326 = vsel %vm319, %v309, %v325
        %331 = vst [vmem:[#allocation3 + $0x60] sm:$0xff] %v320
        %332 = vst [vmem:[#allocation3 + $0x68] sm:$0xff] %v322
        %333 = vst [vmem:[#allocation3 + $0x70] sm:$0xff] %v324
        %334 = vst [vmem:[#allocation3 + $0x78] sm:$0xff] %v326
        %v335 = vld [vmem:[#allocation2] sm:$0xff]
        %v336 = vld [vmem:[#allocation2 + $0x8] sm:$0xff]
        %v337 = vld [vmem:[#allocation2 + $0x10] sm:$0xf]
        %v338 = vld [vmem:[#allocation2 + $0x18] sm:$0xff]
        %v339 = vld [vmem:[#allocation2 + $0x20] sm:$0xff]
        %v340 = vld [vmem:[#allocation2 + $0x28] sm:$0xf]
        %347 = vrot.lane.b32.xlu0 %v335, 117
        %v348 = vpop.permute.xlu0 %347
        %349 = vrot.lane.b32.xlu0 %v336, 117
        %v350 = vpop.permute.xlu0 %349
        %351 = vrot.lane.b32.xlu0 %v337, 117
        %v352 = vpop.permute.xlu0 %351
        %353 = vrot.lane.b32.xlu0 %v338, 117
        %v354 = vpop.permute.xlu0 %353
        %355 = vrot.lane.b32.xlu0 %v339, 117
        %v356 = vpop.permute.xlu0 %355
        %357 = vrot.lane.b32.xlu0 %v340, 117
        %v358 = vpop.permute.xlu0 %357
        %v359 = vrot.slane %v348, 4
        %v360 = vrot.slane %v350, 4
        %v361 = vrot.slane %v352, 4
        %v362 = vrot.slane %v354, 4
        %v363 = vrot.slane %v356, 4
        %v364 = vrot.slane %v358, 4
        %v365 = vsel %vm223, %v359, %v360
        %vm366 = vcmask 957440
        %v367 = vsel %vm366, %v348, %v365
        %v368 = vsel %vm223, %v360, %v361
        %v369 = vsel %vm366, %v350, %v368
        %v370 = vsel %vm223, %v362, %v363
        %v371 = vsel %vm366, %v354, %v370
        %v372 = vsel %vm223, %v363, %v364
        %v373 = vsel %vm366, %v356, %v372
        %378 = vst [vmem:[#allocation3 + $0x80] sm:$0xff] %v367
        %379 = vst [vmem:[#allocation3 + $0x88] sm:$0xff] %v369
        %380 = vst [vmem:[#allocation3 + $0x90] sm:$0xff] %v371
        %381 = vst [vmem:[#allocation3 + $0x98] sm:$0xff] %v373
        %v382 = vld [vmem:[#allocation2] sm:$0xff]
        %v383 = vld [vmem:[#allocation2 + $0x8] sm:$0xff]
        %v384 = vld [vmem:[#allocation2 + $0x10] sm:$0xf]
        %v385 = vld [vmem:[#allocation2 + $0x18] sm:$0xff]
        %v386 = vld [vmem:[#allocation2 + $0x20] sm:$0xff]
        %v387 = vld [vmem:[#allocation2 + $0x28] sm:$0xf]
        %394 = vrot.lane.b32.xlu0 %v382, 116
        %v395 = vpop.permute.xlu0 %394
        %396 = vrot.lane.b32.xlu0 %v383, 116
        %v397 = vpop.permute.xlu0 %396
        %398 = vrot.lane.b32.xlu0 %v384, 116
        %v399 = vpop.permute.xlu0 %398
        %400 = vrot.lane.b32.xlu0 %v385, 116
        %v401 = vpop.permute.xlu0 %400
        %402 = vrot.lane.b32.xlu0 %v386, 116
        %v403 = vpop.permute.xlu0 %402
        %404 = vrot.lane.b32.xlu0 %v387, 116
        %v405 = vpop.permute.xlu0 %404
        %v406 = vrot.slane %v395, 4
        %v407 = vrot.slane %v397, 4
        %v408 = vrot.slane %v399, 4
        %v409 = vrot.slane %v401, 4
        %v410 = vrot.slane %v403, 4
        %v411 = vrot.slane %v405, 4
        %v412 = vsel %vm223, %v406, %v407
        %vm413 = vcmask 949248
        %v414 = vsel %vm413, %v395, %v412
        %v415 = vsel %vm223, %v407, %v408
        %v416 = vsel %vm413, %v397, %v415
        %v417 = vsel %vm223, %v409, %v410
        %v418 = vsel %vm413, %v401, %v417
        %v419 = vsel %vm223, %v410, %v411
        %v420 = vsel %vm413, %v403, %v419
        %425 = vst [vmem:[#allocation3 + $0xa0] sm:$0xff] %v414
        %426 = vst [vmem:[#allocation3 + $0xa8] sm:$0xff] %v416
        %427 = vst [vmem:[#allocation3 + $0xb0] sm:$0xff] %v418
        %428 = vst [vmem:[#allocation3 + $0xb8] sm:$0xff] %v420
        %v429 = vld [vmem:[#allocation2] sm:$0xff]
        %v430 = vld [vmem:[#allocation2 + $0x8] sm:$0xff]
        %v431 = vld [vmem:[#allocation2 + $0x10] sm:$0xf]
        %v432 = vld [vmem:[#allocation2 + $0x18] sm:$0xff]
        %v433 = vld [vmem:[#allocation2 + $0x20] sm:$0xff]
        %v434 = vld [vmem:[#allocation2 + $0x28] sm:$0xf]
        %441 = vrot.lane.b32.xlu0 %v429, 108
        %v442 = vpop.permute.xlu0 %441
        %443 = vrot.lane.b32.xlu0 %v430, 108
        %v444 = vpop.permute.xlu0 %443
        %445 = vrot.lane.b32.xlu0 %v431, 108
        %v446 = vpop.permute.xlu0 %445
        %447 = vrot.lane.b32.xlu0 %v432, 108
        %v448 = vpop.permute.xlu0 %447
        %449 = vrot.lane.b32.xlu0 %v433, 108
        %v450 = vpop.permute.xlu0 %449
        %451 = vrot.lane.b32.xlu0 %v434, 108
        %v452 = vpop.permute.xlu0 %451
        %v453 = vrot.slane %v442, 4
        %v454 = vrot.slane %v444, 4
        %v455 = vrot.slane %v446, 4
        %v456 = vrot.slane %v448, 4
        %v457 = vrot.slane %v450, 4
        %v458 = vrot.slane %v452, 4
        %v459 = vsel %vm223, %v453, %v454
        %vm460 = vcmask 883712
        %v461 = vsel %vm460, %v442, %v459
        %v462 = vsel %vm223, %v454, %v455
        %v463 = vsel %vm460, %v444, %v462
        %v464 = vsel %vm223, %v456, %v457
        %v465 = vsel %vm460, %v448, %v464
        %v466 = vsel %vm223, %v457, %v458
        %v467 = vsel %vm460, %v450, %v466
        %472 = vst [vmem:[#allocation3 + $0xc0] sm:$0xff] %v461
        %473 = vst [vmem:[#allocation3 + $0xc8] sm:$0xff] %v463
        %474 = vst [vmem:[#allocation3 + $0xd0] sm:$0xff] %v465
        %475 = vst [vmem:[#allocation3 + $0xd8] sm:$0xff] %v467
        %v476 = vld [vmem:[#allocation2] sm:$0xff]
        %v477 = vld [vmem:[#allocation2 + $0x8] sm:$0xff]
        %v478 = vld [vmem:[#allocation2 + $0x10] sm:$0xf]
        %v479 = vld [vmem:[#allocation2 + $0x18] sm:$0xff]
        %v480 = vld [vmem:[#allocation2 + $0x20] sm:$0xff]
        %v481 = vld [vmem:[#allocation2 + $0x28] sm:$0xf]
        %488 = vrot.lane.b32.xlu0 %v476, 107
        %v489 = vpop.permute.xlu0 %488
        %490 = vrot.lane.b32.xlu0 %v477, 107
        %v491 = vpop.permute.xlu0 %490
        %492 = vrot.lane.b32.xlu0 %v478, 107
        %v493 = vpop.permute.xlu0 %492
        %494 = vrot.lane.b32.xlu0 %v479, 107
        %v495 = vpop.permute.xlu0 %494
        %496 = vrot.lane.b32.xlu0 %v480, 107
        %v497 = vpop.permute.xlu0 %496
        %498 = vrot.lane.b32.xlu0 %v481, 107
        %v499 = vpop.permute.xlu0 %498
        %v500 = vrot.slane %v489, 4
        %v501 = vrot.slane %v491, 4
        %v502 = vrot.slane %v493, 4
        %v503 = vrot.slane %v495, 4
        %v504 = vrot.slane %v497, 4
        %v505 = vrot.slane %v499, 4
        %v506 = vsel %vm223, %v500, %v501
        %vm507 = vcmask 875520
        %v508 = vsel %vm507, %v489, %v506
        %v509 = vsel %vm223, %v501, %v502
        %v510 = vsel %vm507, %v491, %v509
        %v511 = vsel %vm223, %v503, %v504
        %v512 = vsel %vm507, %v495, %v511
        %v513 = vsel %vm223, %v504, %v505
        %v514 = vsel %vm507, %v497, %v513
        %519 = vst [vmem:[#allocation3 + $0xe0] sm:$0xff] %v508
        %520 = vst [vmem:[#allocation3 + $0xe8] sm:$0xff] %v510
        %521 = vst [vmem:[#allocation3 + $0xf0] sm:$0xff] %v512
        %522 = vst [vmem:[#allocation3 + $0xf8] sm:$0xff] %v514
        %v523 = vld [vmem:[#allocation2] sm:$0xff]
        %v524 = vld [vmem:[#allocation2 + $0x8] sm:$0xff]
        %v525 = vld [vmem:[#allocation2 + $0x10] sm:$0xf]
        %v526 = vld [vmem:[#allocation2 + $0x18] sm:$0xff]
        %v527 = vld [vmem:[#allocation2 + $0x20] sm:$0xff]
        %v528 = vld [vmem:[#allocation2 + $0x28] sm:$0xf]
        %535 = vrot.lane.b32.xlu0 %v523, 106
        %v536 = vpop.permute.xlu0 %535
        %537 = vrot.lane.b32.xlu0 %v524, 106
        %v538 = vpop.permute.xlu0 %537
        %539 = vrot.lane.b32.xlu0 %v525, 106
        %v540 = vpop.permute.xlu0 %539
        %541 = vrot.lane.b32.xlu0 %v526, 106
        %v542 = vpop.permute.xlu0 %541
        %543 = vrot.lane.b32.xlu0 %v527, 106
        %v544 = vpop.permute.xlu0 %543
        %545 = vrot.lane.b32.xlu0 %v528, 106
        %v546 = vpop.permute.xlu0 %545
        %v547 = vrot.slane %v536, 4
        %v548 = vrot.slane %v538, 4
        %v549 = vrot.slane %v540, 4
        %v550 = vrot.slane %v542, 4
        %v551 = vrot.slane %v544, 4
        %v552 = vrot.slane %v546, 4
        %v553 = vsel %vm223, %v547, %v548
        %vm554 = vcmask 867328
        %v555 = vsel %vm554, %v536, %v553
        %v556 = vsel %vm223, %v548, %v549
        %v557 = vsel %vm554, %v538, %v556
        %v558 = vsel %vm223, %v550, %v551
        %v559 = vsel %vm554, %v542, %v558
        %v560 = vsel %vm223, %v551, %v552
        %v561 = vsel %vm554, %v544, %v560
        %566 = vst [vmem:[#allocation3 + $0x100] sm:$0xff] %v555
        %567 = vst [vmem:[#allocation3 + $0x108] sm:$0xff] %v557
        %568 = vst [vmem:[#allocation3 + $0x110] sm:$0xff] %v559
        %569 = vst [vmem:[#allocation3 + $0x118] sm:$0xff] %v561
        %v570 = vld [vmem:[#allocation2] sm:$0xff]
        %v571 = vld [vmem:[#allocation2 + $0x8] sm:$0xff]
        %v572 = vld [vmem:[#allocation2 + $0x10] sm:$0xf]
        %v573 = vld [vmem:[#allocation2 + $0x18] sm:$0xff]
        %v574 = vld [vmem:[#allocation2 + $0x20] sm:$0xff]
        %v575 = vld [vmem:[#allocation2 + $0x28] sm:$0xf]
        %582 = vrot.lane.b32.xlu0 %v570, 28
        %v583 = vpop.permute.xlu0 %582
        %584 = vrot.lane.b32.xlu0 %v571, 28
        %v585 = vpop.permute.xlu0 %584
        %586 = vrot.lane.b32.xlu0 %v572, 28
        %v587 = vpop.permute.xlu0 %586
        %588 = vrot.lane.b32.xlu0 %v573, 28
        %v589 = vpop.permute.xlu0 %588
        %590 = vrot.lane.b32.xlu0 %v574, 28
        %v591 = vpop.permute.xlu0 %590
        %592 = vrot.lane.b32.xlu0 %v575, 28
        %v593 = vpop.permute.xlu0 %592
        %v594 = vrot.slane %v583, 4
        %v595 = vrot.slane %v585, 4
        %v596 = vrot.slane %v587, 4
        %v597 = vrot.slane %v589, 4
        %v598 = vrot.slane %v591, 4
        %v599 = vrot.slane %v593, 4
        %v600 = vsel %vm223, %v594, %v595
        %vm601 = vcmask 228352
        %v602 = vsel %vm601, %v583, %v600
        %v603 = vsel %vm223, %v595, %v596
        %v604 = vsel %vm601, %v585, %v603
        %v605 = vsel %vm223, %v597, %v598
        %v606 = vsel %vm601, %v589, %v605
        %v607 = vsel %vm223, %v598, %v599
        %v608 = vsel %vm601, %v591, %v607
        %613 = vst [vmem:[#allocation3 + $0x120] sm:$0xff] %v602
        %614 = vst [vmem:[#allocation3 + $0x128] sm:$0xff] %v604
        %615 = vst [vmem:[#allocation3 + $0x130] sm:$0xff] %v606
        %616 = vst [vmem:[#allocation3 + $0x138] sm:$0xff] %v608
        %v617 = vld [vmem:[#allocation2] sm:$0xff]
        %v618 = vld [vmem:[#allocation2 + $0x8] sm:$0xff]
        %v619 = vld [vmem:[#allocation2 + $0x10] sm:$0xf]
        %v620 = vld [vmem:[#allocation2 + $0x18] sm:$0xff]
        %v621 = vld [vmem:[#allocation2 + $0x20] sm:$0xff]
        %v622 = vld [vmem:[#allocation2 + $0x28] sm:$0xf]
        %629 = vrot.lane.b32.xlu0 %v617, 27
        %v630 = vpop.permute.xlu0 %629
        %631 = vrot.lane.b32.xlu0 %v618, 27
        %v632 = vpop.permute.xlu0 %631
        %633 = vrot.lane.b32.xlu0 %v619, 27
        %v634 = vpop.permute.xlu0 %633
        %635 = vrot.lane.b32.xlu0 %v620, 27
        %v636 = vpop.permute.xlu0 %635
        %637 = vrot.lane.b32.xlu0 %v621, 27
        %v638 = vpop.permute.xlu0 %637
        %639 = vrot.lane.b32.xlu0 %v622, 27
        %v640 = vpop.permute.xlu0 %639
        %v641 = vrot.slane %v630, 4
        %v642 = vrot.slane %v632, 4
        %v643 = vrot.slane %v634, 4
        %v644 = vrot.slane %v636, 4
        %v645 = vrot.slane %v638, 4
        %v646 = vrot.slane %v640, 4
        %v647 = vsel %vm223, %v641, %v642
        %vm648 = vcmask 220160
        %v649 = vsel %vm648, %v630, %v647
        %v650 = vsel %vm223, %v642, %v643
        %v651 = vsel %vm648, %v632, %v650
        %v652 = vsel %vm223, %v644, %v645
        %v653 = vsel %vm648, %v636, %v652
        %v654 = vsel %vm223, %v645, %v646
        %v655 = vsel %vm648, %v638, %v654
        %660 = vst [vmem:[#allocation3 + $0x140] sm:$0xff] %v649
        %661 = vst [vmem:[#allocation3 + $0x148] sm:$0xff] %v651
        %662 = vst [vmem:[#allocation3 + $0x150] sm:$0xff] %v653
        %663 = vst [vmem:[#allocation3 + $0x158] sm:$0xff] %v655
        %v664 = vld [vmem:[#allocation2] sm:$0xff]
        %v665 = vld [vmem:[#allocation2 + $0x8] sm:$0xff]
        %v666 = vld [vmem:[#allocation2 + $0x10] sm:$0xf]
        %v667 = vld [vmem:[#allocation2 + $0x18] sm:$0xff]
        %v668 = vld [vmem:[#allocation2 + $0x20] sm:$0xff]
        %v669 = vld [vmem:[#allocation2 + $0x28] sm:$0xf]
        %676 = vrot.lane.b32.xlu0 %v664, 26
        %v677 = vpop.permute.xlu0 %676
        %678 = vrot.lane.b32.xlu0 %v665, 26
        %v679 = vpop.permute.xlu0 %678
        %680 = vrot.lane.b32.xlu0 %v666, 26
        %v681 = vpop.permute.xlu0 %680
        %682 = vrot.lane.b32.xlu0 %v667, 26
        %v683 = vpop.permute.xlu0 %682
        %684 = vrot.lane.b32.xlu0 %v668, 26
        %v685 = vpop.permute.xlu0 %684
        %686 = vrot.lane.b32.xlu0 %v669, 26
        %v687 = vpop.permute.xlu0 %686
        %v688 = vrot.slane %v677, 4
        %v689 = vrot.slane %v679, 4
        %v690 = vrot.slane %v681, 4
        %v691 = vrot.slane %v683, 4
        %v692 = vrot.slane %v685, 4
        %v693 = vrot.slane %v687, 4
        %v694 = vsel %vm223, %v688, %v689
        %vm695 = vcmask 211968
        %v696 = vsel %vm695, %v677, %v694
        %v697 = vsel %vm223, %v689, %v690
        %v698 = vsel %vm695, %v679, %v697
        %v699 = vsel %vm223, %v691, %v692
        %v700 = vsel %vm695, %v683, %v699
        %v701 = vsel %vm223, %v692, %v693
        %v702 = vsel %vm695, %v685, %v701
        %707 = vst [vmem:[#allocation3 + $0x160] sm:$0xff] %v696
        %708 = vst [vmem:[#allocation3 + $0x168] sm:$0xff] %v698
        %709 = vst [vmem:[#allocation3 + $0x170] sm:$0xff] %v700
        %710 = vst [vmem:[#allocation3 + $0x178] sm:$0xff] %v702
        %v711 = vld [vmem:[#allocation2] sm:$0xff]
        %v712 = vld [vmem:[#allocation2 + $0x8] sm:$0xff]
        %v713 = vld [vmem:[#allocation2 + $0x10] sm:$0xf]
        %v714 = vld [vmem:[#allocation2 + $0x18] sm:$0xff]
        %v715 = vld [vmem:[#allocation2 + $0x20] sm:$0xff]
        %v716 = vld [vmem:[#allocation2 + $0x28] sm:$0xf]
        %723 = vrot.lane.b32.xlu0 %v711, 18
        %v724 = vpop.permute.xlu0 %723
        %725 = vrot.lane.b32.xlu0 %v712, 18
        %v726 = vpop.permute.xlu0 %725
        %727 = vrot.lane.b32.xlu0 %v713, 18
        %v728 = vpop.permute.xlu0 %727
        %729 = vrot.lane.b32.xlu0 %v714, 18
        %v730 = vpop.permute.xlu0 %729
        %731 = vrot.lane.b32.xlu0 %v715, 18
        %v732 = vpop.permute.xlu0 %731
        %733 = vrot.lane.b32.xlu0 %v716, 18
        %v734 = vpop.permute.xlu0 %733
        %v735 = vrot.slane %v724, 4
        %v736 = vrot.slane %v726, 4
        %v737 = vrot.slane %v728, 4
        %v738 = vrot.slane %v730, 4
        %v739 = vrot.slane %v732, 4
        %v740 = vrot.slane %v734, 4
        %v741 = vsel %vm223, %v735, %v736
        %vm742 = vcmask 146432
        %v743 = vsel %vm742, %v724, %v741
        %v744 = vsel %vm223, %v736, %v737
        %v745 = vsel %vm742, %v726, %v744
        %v746 = vsel %vm223, %v738, %v739
        %v747 = vsel %vm742, %v730, %v746
        %v748 = vsel %vm223, %v739, %v740
        %v749 = vsel %vm742, %v732, %v748
        %754 = vst [vmem:[#allocation3 + $0x180] sm:$0xff] %v743
        %755 = vst [vmem:[#allocation3 + $0x188] sm:$0xff] %v745
        %756 = vst [vmem:[#allocation3 + $0x190] sm:$0xff] %v747
        %757 = vst [vmem:[#allocation3 + $0x198] sm:$0xff] %v749
        %v758 = vld [vmem:[#allocation2] sm:$0xff]
        %v759 = vld [vmem:[#allocation2 + $0x8] sm:$0xff]
        %v760 = vld [vmem:[#allocation2 + $0x10] sm:$0xf]
        %v761 = vld [vmem:[#allocation2 + $0x18] sm:$0xff]
        %v762 = vld [vmem:[#allocation2 + $0x20] sm:$0xff]
        %v763 = vld [vmem:[#allocation2 + $0x28] sm:$0xf]
        %770 = vrot.lane.b32.xlu0 %v758, 17
        %v771 = vpop.permute.xlu0 %770
        %772 = vrot.lane.b32.xlu0 %v759, 17
        %v773 = vpop.permute.xlu0 %772
        %774 = vrot.lane.b32.xlu0 %v760, 17
        %v775 = vpop.permute.xlu0 %774
        %776 = vrot.lane.b32.xlu0 %v761, 17
        %v777 = vpop.permute.xlu0 %776
        %778 = vrot.lane.b32.xlu0 %v762, 17
        %v779 = vpop.permute.xlu0 %778
        %780 = vrot.lane.b32.xlu0 %v763, 17
        %v781 = vpop.permute.xlu0 %780
        %v782 = vrot.slane %v771, 4
        %v783 = vrot.slane %v773, 4
        %v784 = vrot.slane %v775, 4
        %v785 = vrot.slane %v777, 4
        %v786 = vrot.slane %v779, 4
        %v787 = vrot.slane %v781, 4
        %v788 = vsel %vm223, %v782, %v783
        %vm789 = vcmask 138240
        %v790 = vsel %vm789, %v771, %v788
        %v791 = vsel %vm223, %v783, %v784
        %v792 = vsel %vm789, %v773, %v791
        %v793 = vsel %vm223, %v785, %v786
        %v794 = vsel %vm789, %v777, %v793
        %v795 = vsel %vm223, %v786, %v787
        %v796 = vsel %vm789, %v779, %v795
        %801 = vst [vmem:[#allocation3 + $0x1a0] sm:$0xff] %v790
        %802 = vst [vmem:[#allocation3 + $0x1a8] sm:$0xff] %v792
        %803 = vst [vmem:[#allocation3 + $0x1b0] sm:$0xff] %v794
        %804 = vst [vmem:[#allocation3 + $0x1b8] sm:$0xff] %v796
        %v805 = vld [vmem:[#allocation2] sm:$0xff]
        %v806 = vld [vmem:[#allocation2 + $0x8] sm:$0xff]
        %v807 = vld [vmem:[#allocation2 + $0x10] sm:$0xf]
        %v808 = vld [vmem:[#allocation2 + $0x18] sm:$0xff]
        %v809 = vld [vmem:[#allocation2 + $0x20] sm:$0xff]
        %v810 = vld [vmem:[#allocation2 + $0x28] sm:$0xf]
        %817 = vrot.lane.b32.xlu0 %v805, 16
        %v818 = vpop.permute.xlu0 %817
        %819 = vrot.lane.b32.xlu0 %v806, 16
        %v820 = vpop.permute.xlu0 %819
        %821 = vrot.lane.b32.xlu0 %v807, 16
        %v822 = vpop.permute.xlu0 %821
        %823 = vrot.lane.b32.xlu0 %v808, 16
        %v824 = vpop.permute.xlu0 %823
        %825 = vrot.lane.b32.xlu0 %v809, 16
        %v826 = vpop.permute.xlu0 %825
        %827 = vrot.lane.b32.xlu0 %v810, 16
        %v828 = vpop.permute.xlu0 %827
        %v829 = vrot.slane %v818, 4
        %v830 = vrot.slane %v820, 4
        %v831 = vrot.slane %v822, 4
        %v832 = vrot.slane %v824, 4
        %v833 = vrot.slane %v826, 4
        %v834 = vrot.slane %v828, 4
        %v835 = vsel %vm223, %v829, %v830
        %vm836 = vcmask 130048
        %v837 = vsel %vm836, %v818, %v835
        %v838 = vsel %vm223, %v830, %v831
        %v839 = vsel %vm836, %v820, %v838
        %v840 = vsel %vm223, %v832, %v833
        %v841 = vsel %vm836, %v824, %v840
        %v842 = vsel %vm223, %v833, %v834
        %v843 = vsel %vm836, %v826, %v842
        %848 = vst [vmem:[#allocation3 + $0x1c0] sm:$0xff] %v837
        %849 = vst [vmem:[#allocation3 + $0x1c8] sm:$0xff] %v839
        %850 = vst [vmem:[#allocation3 + $0x1d0] sm:$0xff] %v841
        %851 = vst [vmem:[#allocation3 + $0x1d8] sm:$0xff] %v843
        %v852 = vld [vmem:[#allocation2] sm:$0xff]
        %v853 = vld [vmem:[#allocation2 + $0x8] sm:$0xff]
        %v854 = vld [vmem:[#allocation2 + $0x10] sm:$0xf]
        %v855 = vld [vmem:[#allocation2 + $0x18] sm:$0xff]
        %v856 = vld [vmem:[#allocation2 + $0x20] sm:$0xff]
        %v857 = vld [vmem:[#allocation2 + $0x28] sm:$0xf]
        %864 = vrot.lane.b32.xlu0 %v852, 8
        %v865 = vpop.permute.xlu0 %864
        %866 = vrot.lane.b32.xlu0 %v853, 8
        %v867 = vpop.permute.xlu0 %866
        %868 = vrot.lane.b32.xlu0 %v854, 8
        %v869 = vpop.permute.xlu0 %868
        %870 = vrot.lane.b32.xlu0 %v855, 8
        %v871 = vpop.permute.xlu0 %870
        %872 = vrot.lane.b32.xlu0 %v856, 8
        %v873 = vpop.permute.xlu0 %872
        %874 = vrot.lane.b32.xlu0 %v857, 8
        %v875 = vpop.permute.xlu0 %874
        %v876 = vrot.slane %v865, 4
        %v877 = vrot.slane %v867, 4
        %v878 = vrot.slane %v869, 4
        %v879 = vrot.slane %v871, 4
        %v880 = vrot.slane %v873, 4
        %v881 = vrot.slane %v875, 4
        %v882 = vsel %vm223, %v876, %v877
        %vm883 = vcmask 64512
        %v884 = vsel %vm883, %v865, %v882
        %v885 = vsel %vm223, %v877, %v878
        %v886 = vsel %vm883, %v867, %v885
        %v887 = vsel %vm223, %v879, %v880
        %v888 = vsel %vm883, %v871, %v887
        %v889 = vsel %vm223, %v880, %v881
        %v890 = vsel %vm883, %v873, %v889
        %895 = vst [vmem:[#allocation3 + $0x1e0] sm:$0xff] %v884
        %896 = vst [vmem:[#allocation3 + $0x1e8] sm:$0xff] %v886
        %897 = vst [vmem:[#allocation3 + $0x1f0] sm:$0xff] %v888
        %898 = vst [vmem:[#allocation3 + $0x1f8] sm:$0xff] %v890
        %v899 = vld [vmem:[#allocation2] sm:$0xff]
        %v900 = vld [vmem:[#allocation2 + $0x8] sm:$0xff]
        %v901 = vld [vmem:[#allocation2 + $0x10] sm:$0xf]
        %v902 = vld [vmem:[#allocation2 + $0x18] sm:$0xff]
        %v903 = vld [vmem:[#allocation2 + $0x20] sm:$0xff]
        %v904 = vld [vmem:[#allocation2 + $0x28] sm:$0xf]
        %911 = vrot.lane.b32.xlu0 %v899, 7
        %v912 = vpop.permute.xlu0 %911
        %913 = vrot.lane.b32.xlu0 %v900, 7
        %v914 = vpop.permute.xlu0 %913
        %915 = vrot.lane.b32.xlu0 %v901, 7
        %v916 = vpop.permute.xlu0 %915
        %917 = vrot.lane.b32.xlu0 %v902, 7
        %v918 = vpop.permute.xlu0 %917
        %919 = vrot.lane.b32.xlu0 %v903, 7
        %v920 = vpop.permute.xlu0 %919
        %921 = vrot.lane.b32.xlu0 %v904, 7
        %v922 = vpop.permute.xlu0 %921
        %v923 = vrot.slane %v912, 4
        %v924 = vrot.slane %v914, 4
        %v925 = vrot.slane %v916, 4
        %v926 = vrot.slane %v918, 4
        %v927 = vrot.slane %v920, 4
        %v928 = vrot.slane %v922, 4
        %v929 = vsel %vm223, %v923, %v924
        %vm930 = vcmask 56320
        %v931 = vsel %vm930, %v912, %v929
        %v932 = vsel %vm223, %v924, %v925
        %v933 = vsel %vm930, %v914, %v932
        %v934 = vsel %vm223, %v926, %v927
        %v935 = vsel %vm930, %v918, %v934
        %v936 = vsel %vm223, %v927, %v928
        %v937 = vsel %vm930, %v920, %v936
        %942 = vst [vmem:[#allocation3 + $0x200] sm:$0xff] %v931
        %943 = vst [vmem:[#allocation3 + $0x208] sm:$0xff] %v933
        %944 = vst [vmem:[#allocation3 + $0x210] sm:$0xff] %v935
        %945 = vst [vmem:[#allocation3 + $0x218] sm:$0xff] %v937
        %v946 = vld [vmem:[#allocation2] sm:$0xff]
        %v947 = vld [vmem:[#allocation2 + $0x8] sm:$0xff]
        %v948 = vld [vmem:[#allocation2 + $0x10] sm:$0xf]
        %v949 = vld [vmem:[#allocation2 + $0x18] sm:$0xff]
        %v950 = vld [vmem:[#allocation2 + $0x20] sm:$0xff]
        %v951 = vld [vmem:[#allocation2 + $0x28] sm:$0xf]
        %958 = vrot.lane.b32.xlu0 %v946, 6
        %v959 = vpop.permute.xlu0 %958
        %960 = vrot.lane.b32.xlu0 %v947, 6
        %v961 = vpop.permute.xlu0 %960
        %962 = vrot.lane.b32.xlu0 %v948, 6
        %v963 = vpop.permute.xlu0 %962
        %964 = vrot.lane.b32.xlu0 %v949, 6
        %v965 = vpop.permute.xlu0 %964
        %966 = vrot.lane.b32.xlu0 %v950, 6
        %v967 = vpop.permute.xlu0 %966
        %968 = vrot.lane.b32.xlu0 %v951, 6
        %v969 = vpop.permute.xlu0 %968
        %v970 = vrot.slane %v959, 4
        %v971 = vrot.slane %v961, 4
        %v972 = vrot.slane %v963, 4
        %v973 = vrot.slane %v965, 4
        %v974 = vrot.slane %v967, 4
        %v975 = vrot.slane %v969, 4
        %v976 = vsel %vm223, %v970, %v971
        %vm977 = vcmask 48128
        %v978 = vsel %vm977, %v959, %v976
        %v979 = vsel %vm223, %v971, %v972
        %v980 = vsel %vm977, %v961, %v979
        %v981 = vsel %vm223, %v973, %v974
        %v982 = vsel %vm977, %v965, %v981
        %v983 = vsel %vm223, %v974, %v975
        %v984 = vsel %vm977, %v967, %v983
        %989 = vst [vmem:[#allocation3 + $0x220] sm:$0xff] %v978
        %990 = vst [vmem:[#allocation3 + $0x228] sm:$0xff] %v980
        %991 = vst [vmem:[#allocation3 + $0x230] sm:$0xff] %v982
        %992 = vst [vmem:[#allocation3 + $0x238] sm:$0xff] %v984
        %v993 = vld [vmem:[#allocation2 + $0x4] sm:$0xff]
        %v994 = vld [vmem:[#allocation2 + $0xc] sm:$0xff]
        %v995 = vld [vmem:[#allocation2 + $0x14] sm:$0xf]
        %v996 = vld [vmem:[#allocation2 + $0x1c] sm:$0xff]
        %v997 = vld [vmem:[#allocation2 + $0x24] sm:$0xff]
        %v998 = vld [vmem:[#allocation2 + $0x2c] sm:$0xf]
        %1005 = vrot.lane.b32.xlu0 %v993, 56
        %v1006 = vpop.permute.xlu0 %1005
        %1007 = vrot.lane.b32.xlu0 %v994, 56
        %v1008 = vpop.permute.xlu0 %1007
        %1009 = vrot.lane.b32.xlu0 %v995, 56
        %v1010 = vpop.permute.xlu0 %1009
        %1011 = vrot.lane.b32.xlu0 %v996, 56
        %v1012 = vpop.permute.xlu0 %1011
        %1013 = vrot.lane.b32.xlu0 %v997, 56
        %v1014 = vpop.permute.xlu0 %1013
        %1015 = vrot.lane.b32.xlu0 %v998, 56
        %v1016 = vpop.permute.xlu0 %1015
        %v1017 = vrot.slane %v1006, 4
        %v1018 = vrot.slane %v1008, 4
        %v1019 = vrot.slane %v1010, 4
        %v1020 = vrot.slane %v1012, 4
        %v1021 = vrot.slane %v1014, 4
        %v1022 = vrot.slane %v1016, 4
        %v1023 = vsel %vm223, %v1017, %v1018
        %vm1024 = vcmask 457728
        %v1025 = vsel %vm1024, %v1006, %v1023
        %v1026 = vsel %vm223, %v1018, %v1019
        %v1027 = vsel %vm1024, %v1008, %v1026
        %v1028 = vsel %vm223, %v1020, %v1021
        %v1029 = vsel %vm1024, %v1012, %v1028
        %v1030 = vsel %vm223, %v1021, %v1022
        %v1031 = vsel %vm1024, %v1014, %v1030
        %1036 = vst [vmem:[#allocation3 + $0x240] sm:$0xff] %v1025
        %1037 = vst [vmem:[#allocation3 + $0x248] sm:$0xff] %v1027
        %1038 = vst [vmem:[#allocation3 + $0x250] sm:$0xff] %v1029
        %1039 = vst [vmem:[#allocation3 + $0x258] sm:$0xff] %v1031
        %v1040 = vld [vmem:[#allocation2 + $0x4] sm:$0xff]
        %v1041 = vld [vmem:[#allocation2 + $0xc] sm:$0xff]
        %v1042 = vld [vmem:[#allocation2 + $0x14] sm:$0xf]
        %v1043 = vld [vmem:[#allocation2 + $0x1c] sm:$0xff]
        %v1044 = vld [vmem:[#allocation2 + $0x24] sm:$0xff]
        %v1045 = vld [vmem:[#allocation2 + $0x2c] sm:$0xf]
        %1052 = vrot.lane.b32.xlu0 %v1040, 55
        %v1053 = vpop.permute.xlu0 %1052
        %1054 = vrot.lane.b32.xlu0 %v1041, 55
        %v1055 = vpop.permute.xlu0 %1054
        %1056 = vrot.lane.b32.xlu0 %v1042, 55
        %v1057 = vpop.permute.xlu0 %1056
        %1058 = vrot.lane.b32.xlu0 %v1043, 55
        %v1059 = vpop.permute.xlu0 %1058
        %1060 = vrot.lane.b32.xlu0 %v1044, 55
        %v1061 = vpop.permute.xlu0 %1060
        %1062 = vrot.lane.b32.xlu0 %v1045, 55
        %v1063 = vpop.permute.xlu0 %1062
        %v1064 = vrot.slane %v1053, 4
        %v1065 = vrot.slane %v1055, 4
        %v1066 = vrot.slane %v1057, 4
        %v1067 = vrot.slane %v1059, 4
        %v1068 = vrot.slane %v1061, 4
        %v1069 = vrot.slane %v1063, 4
        %v1070 = vsel %vm223, %v1064, %v1065
        %vm1071 = vcmask 449536
        %v1072 = vsel %vm1071, %v1053, %v1070
        %v1073 = vsel %vm223, %v1065, %v1066
        %v1074 = vsel %vm1071, %v1055, %v1073
        %v1075 = vsel %vm223, %v1067, %v1068
        %v1076 = vsel %vm1071, %v1059, %v1075
        %v1077 = vsel %vm223, %v1068, %v1069
        %v1078 = vsel %vm1071, %v1061, %v1077
        %1083 = vst [vmem:[#allocation3 + $0x260] sm:$0xff] %v1072
        %1084 = vst [vmem:[#allocation3 + $0x268] sm:$0xff] %v1074
        %1085 = vst [vmem:[#allocation3 + $0x270] sm:$0xff] %v1076
        %1086 = vst [vmem:[#allocation3 + $0x278] sm:$0xff] %v1078
        %v1087 = vld [vmem:[#allocation2 + $0x4] sm:$0xff]
        %v1088 = vld [vmem:[#allocation2 + $0xc] sm:$0xff]
        %v1089 = vld [vmem:[#allocation2 + $0x14] sm:$0xf]
        %v1090 = vld [vmem:[#allocation2 + $0x1c] sm:$0xff]
        %v1091 = vld [vmem:[#allocation2 + $0x24] sm:$0xff]
        %v1092 = vld [vmem:[#allocation2 + $0x2c] sm:$0xf]
        %1099 = vrot.lane.b32.xlu0 %v1087, 54
        %v1100 = vpop.permute.xlu0 %1099
        %1101 = vrot.lane.b32.xlu0 %v1088, 54
        %v1102 = vpop.permute.xlu0 %1101
        %1103 = vrot.lane.b32.xlu0 %v1089, 54
        %v1104 = vpop.permute.xlu0 %1103
        %1105 = vrot.lane.b32.xlu0 %v1090, 54
        %v1106 = vpop.permute.xlu0 %1105
        %1107 = vrot.lane.b32.xlu0 %v1091, 54
        %v1108 = vpop.permute.xlu0 %1107
        %1109 = vrot.lane.b32.xlu0 %v1092, 54
        %v1110 = vpop.permute.xlu0 %1109
        %v1111 = vrot.slane %v1100, 4
        %v1112 = vrot.slane %v1102, 4
        %v1113 = vrot.slane %v1104, 4
        %v1114 = vrot.slane %v1106, 4
        %v1115 = vrot.slane %v1108, 4
        %v1116 = vrot.slane %v1110, 4
        %v1117 = vsel %vm223, %v1111, %v1112
        %vm1118 = vcmask 441344
        %v1119 = vsel %vm1118, %v1100, %v1117
        %v1120 = vsel %vm223, %v1112, %v1113
        %v1121 = vsel %vm1118, %v1102, %v1120
        %v1122 = vsel %vm223, %v1114, %v1115
        %v1123 = vsel %vm1118, %v1106, %v1122
        %v1124 = vsel %vm223, %v1115, %v1116
        %v1125 = vsel %vm1118, %v1108, %v1124
        %1130 = vst [vmem:[#allocation3 + $0x280] sm:$0xff] %v1119
        %1131 = vst [vmem:[#allocation3 + $0x288] sm:$0xff] %v1121
        %1132 = vst [vmem:[#allocation3 + $0x290] sm:$0xff] %v1123
        %1133 = vst [vmem:[#allocation3 + $0x298] sm:$0xff] %v1125
        %v1134 = vld [vmem:[#allocation2 + $0x4] sm:$0xff]
        %v1135 = vld [vmem:[#allocation2 + $0xc] sm:$0xff]
        %v1136 = vld [vmem:[#allocation2 + $0x14] sm:$0xf]
        %v1137 = vld [vmem:[#allocation2 + $0x1c] sm:$0xff]
        %v1138 = vld [vmem:[#allocation2 + $0x24] sm:$0xff]
        %v1139 = vld [vmem:[#allocation2 + $0x2c] sm:$0xf]
        %1146 = vrot.lane.b32.xlu0 %v1134, 46
        %v1147 = vpop.permute.xlu0 %1146
        %1148 = vrot.lane.b32.xlu0 %v1135, 46
        %v1149 = vpop.permute.xlu0 %1148
        %1150 = vrot.lane.b32.xlu0 %v1136, 46
        %v1151 = vpop.permute.xlu0 %1150
        %1152 = vrot.lane.b32.xlu0 %v1137, 46
        %v1153 = vpop.permute.xlu0 %1152
        %1154 = vrot.lane.b32.xlu0 %v1138, 46
        %v1155 = vpop.permute.xlu0 %1154
        %1156 = vrot.lane.b32.xlu0 %v1139, 46
        %v1157 = vpop.permute.xlu0 %1156
        %v1158 = vrot.slane %v1147, 4
        %v1159 = vrot.slane %v1149, 4
        %v1160 = vrot.slane %v1151, 4
        %v1161 = vrot.slane %v1153, 4
        %v1162 = vrot.slane %v1155, 4
        %v1163 = vrot.slane %v1157, 4
        %v1164 = vsel %vm223, %v1158, %v1159
        %vm1165 = vcmask 375808
        %v1166 = vsel %vm1165, %v1147, %v1164
        %v1167 = vsel %vm223, %v1159, %v1160
        %v1168 = vsel %vm1165, %v1149, %v1167
        %v1169 = vsel %vm223, %v1161, %v1162
        %v1170 = vsel %vm1165, %v1153, %v1169
        %v1171 = vsel %vm223, %v1162, %v1163
        %v1172 = vsel %vm1165, %v1155, %v1171
        %1177 = vst [vmem:[#allocation3 + $0x2a0] sm:$0xff] %v1166
        %1178 = vst [vmem:[#allocation3 + $0x2a8] sm:$0xff] %v1168
        %1179 = vst [vmem:[#allocation3 + $0x2b0] sm:$0xff] %v1170
        %1180 = vst [vmem:[#allocation3 + $0x2b8] sm:$0xff] %v1172
        %v1181 = vld [vmem:[#allocation2 + $0x4] sm:$0xff]
        %v1182 = vld [vmem:[#allocation2 + $0xc] sm:$0xff]
        %v1183 = vld [vmem:[#allocation2 + $0x14] sm:$0xf]
        %v1184 = vld [vmem:[#allocation2 + $0x1c] sm:$0xff]
        %v1185 = vld [vmem:[#allocation2 + $0x24] sm:$0xff]
        %v1186 = vld [vmem:[#allocation2 + $0x2c] sm:$0xf]
        %1193 = vrot.lane.b32.xlu0 %v1181, 45
        %v1194 = vpop.permute.xlu0 %1193
        %1195 = vrot.lane.b32.xlu0 %v1182, 45
        %v1196 = vpop.permute.xlu0 %1195
        %1197 = vrot.lane.b32.xlu0 %v1183, 45
        %v1198 = vpop.permute.xlu0 %1197
        %1199 = vrot.lane.b32.xlu0 %v1184, 45
        %v1200 = vpop.permute.xlu0 %1199
        %1201 = vrot.lane.b32.xlu0 %v1185, 45
        %v1202 = vpop.permute.xlu0 %1201
        %1203 = vrot.lane.b32.xlu0 %v1186, 45
        %v1204 = vpop.permute.xlu0 %1203
        %v1205 = vrot.slane %v1194, 4
        %v1206 = vrot.slane %v1196, 4
        %v1207 = vrot.slane %v1198, 4
        %v1208 = vrot.slane %v1200, 4
        %v1209 = vrot.slane %v1202, 4
        %v1210 = vrot.slane %v1204, 4
        %v1211 = vsel %vm223, %v1205, %v1206
        %vm1212 = vcmask 367616
        %v1213 = vsel %vm1212, %v1194, %v1211
        %v1214 = vsel %vm223, %v1206, %v1207
        %v1215 = vsel %vm1212, %v1196, %v1214
        %v1216 = vsel %vm223, %v1208, %v1209
        %v1217 = vsel %vm1212, %v1200, %v1216
        %v1218 = vsel %vm223, %v1209, %v1210
        %v1219 = vsel %vm1212, %v1202, %v1218
        %1224 = vst [vmem:[#allocation3 + $0x2c0] sm:$0xff] %v1213
        %1225 = vst [vmem:[#allocation3 + $0x2c8] sm:$0xff] %v1215
        %1226 = vst [vmem:[#allocation3 + $0x2d0] sm:$0xff] %v1217
        %1227 = vst [vmem:[#allocation3 + $0x2d8] sm:$0xff] %v1219
        %v1228 = vld [vmem:[#allocation2 + $0x4] sm:$0xff]
        %v1229 = vld [vmem:[#allocation2 + $0xc] sm:$0xff]
        %v1230 = vld [vmem:[#allocation2 + $0x14] sm:$0xf]
        %v1231 = vld [vmem:[#allocation2 + $0x1c] sm:$0xff]
        %v1232 = vld [vmem:[#allocation2 + $0x24] sm:$0xff]
        %v1233 = vld [vmem:[#allocation2 + $0x2c] sm:$0xf]
        %1240 = vrot.lane.b32.xlu0 %v1228, 44
        %v1241 = vpop.permute.xlu0 %1240
        %1242 = vrot.lane.b32.xlu0 %v1229, 44
        %v1243 = vpop.permute.xlu0 %1242
        %1244 = vrot.lane.b32.xlu0 %v1230, 44
        %v1245 = vpop.permute.xlu0 %1244
        %1246 = vrot.lane.b32.xlu0 %v1231, 44
        %v1247 = vpop.permute.xlu0 %1246
        %1248 = vrot.lane.b32.xlu0 %v1232, 44
        %v1249 = vpop.permute.xlu0 %1248
        %1250 = vrot.lane.b32.xlu0 %v1233, 44
        %v1251 = vpop.permute.xlu0 %1250
        %v1252 = vrot.slane %v1241, 4
        %v1253 = vrot.slane %v1243, 4
        %v1254 = vrot.slane %v1245, 4
        %v1255 = vrot.slane %v1247, 4
        %v1256 = vrot.slane %v1249, 4
        %v1257 = vrot.slane %v1251, 4
        %v1258 = vsel %vm223, %v1252, %v1253
        %vm1259 = vcmask 359424
        %v1260 = vsel %vm1259, %v1241, %v1258
        %v1261 = vsel %vm223, %v1253, %v1254
        %v1262 = vsel %vm1259, %v1243, %v1261
        %v1263 = vsel %vm223, %v1255, %v1256
        %v1264 = vsel %vm1259, %v1247, %v1263
        %v1265 = vsel %vm223, %v1256, %v1257
        %v1266 = vsel %vm1259, %v1249, %v1265
        %1271 = vst [vmem:[#allocation3 + $0x2e0] sm:$0xff] %v1260
        %1272 = vst [vmem:[#allocation3 + $0x2e8] sm:$0xff] %v1262
        %1273 = vst [vmem:[#allocation3 + $0x2f0] sm:$0xff] %v1264
        %1274 = vst [vmem:[#allocation3 + $0x2f8] sm:$0xff] %v1266
        %v1275 = vld [vmem:[#allocation2 + $0x4] sm:$0xff]
        %v1276 = vld [vmem:[#allocation2 + $0xc] sm:$0xff]
        %v1277 = vld [vmem:[#allocation2 + $0x14] sm:$0xf]
        %v1278 = vld [vmem:[#allocation2 + $0x1c] sm:$0xff]
        %v1279 = vld [vmem:[#allocation2 + $0x24] sm:$0xff]
        %v1280 = vld [vmem:[#allocation2 + $0x2c] sm:$0xf]
        %1287 = vrot.lane.b32.xlu0 %v1275, 36
        %v1288 = vpop.permute.xlu0 %1287
        %1289 = vrot.lane.b32.xlu0 %v1276, 36
        %v1290 = vpop.permute.xlu0 %1289
        %1291 = vrot.lane.b32.xlu0 %v1277, 36
        %v1292 = vpop.permute.xlu0 %1291
        %1293 = vrot.lane.b32.xlu0 %v1278, 36
        %v1294 = vpop.permute.xlu0 %1293
        %1295 = vrot.lane.b32.xlu0 %v1279, 36
        %v1296 = vpop.permute.xlu0 %1295
        %1297 = vrot.lane.b32.xlu0 %v1280, 36
        %v1298 = vpop.permute.xlu0 %1297
        %v1299 = vrot.slane %v1288, 4
        %v1300 = vrot.slane %v1290, 4
        %v1301 = vrot.slane %v1292, 4
        %v1302 = vrot.slane %v1294, 4
        %v1303 = vrot.slane %v1296, 4
        %v1304 = vrot.slane %v1298, 4
        %v1305 = vsel %vm223, %v1299, %v1300
        %vm1306 = vcmask 293888
        %v1307 = vsel %vm1306, %v1288, %v1305
        %v1308 = vsel %vm223, %v1300, %v1301
        %v1309 = vsel %vm1306, %v1290, %v1308
        %v1310 = vsel %vm223, %v1302, %v1303
        %v1311 = vsel %vm1306, %v1294, %v1310
        %v1312 = vsel %vm223, %v1303, %v1304
        %v1313 = vsel %vm1306, %v1296, %v1312
        %1318 = vst [vmem:[#allocation3 + $0x300] sm:$0xff] %v1307
        %1319 = vst [vmem:[#allocation3 + $0x308] sm:$0xff] %v1309
        %1320 = vst [vmem:[#allocation3 + $0x310] sm:$0xff] %v1311
        %1321 = vst [vmem:[#allocation3 + $0x318] sm:$0xff] %v1313
        %v1322 = vld [vmem:[#allocation2 + $0x4] sm:$0xff]
        %v1323 = vld [vmem:[#allocation2 + $0xc] sm:$0xff]
        %v1324 = vld [vmem:[#allocation2 + $0x14] sm:$0xf]
        %v1325 = vld [vmem:[#allocation2 + $0x1c] sm:$0xff]
        %v1326 = vld [vmem:[#allocation2 + $0x24] sm:$0xff]
        %v1327 = vld [vmem:[#allocation2 + $0x2c] sm:$0xf]
        %1334 = vrot.lane.b32.xlu0 %v1322, 35
        %v1335 = vpop.permute.xlu0 %1334
        %1336 = vrot.lane.b32.xlu0 %v1323, 35
        %v1337 = vpop.permute.xlu0 %1336
        %1338 = vrot.lane.b32.xlu0 %v1324, 35
        %v1339 = vpop.permute.xlu0 %1338
        %1340 = vrot.lane.b32.xlu0 %v1325, 35
        %v1341 = vpop.permute.xlu0 %1340
        %1342 = vrot.lane.b32.xlu0 %v1326, 35
        %v1343 = vpop.permute.xlu0 %1342
        %1344 = vrot.lane.b32.xlu0 %v1327, 35
        %v1345 = vpop.permute.xlu0 %1344
        %v1346 = vrot.slane %v1335, 4
        %v1347 = vrot.slane %v1337, 4
        %v1348 = vrot.slane %v1339, 4
        %v1349 = vrot.slane %v1341, 4
        %v1350 = vrot.slane %v1343, 4
        %v1351 = vrot.slane %v1345, 4
        %v1352 = vsel %vm223, %v1346, %v1347
        %vm1353 = vcmask 285696
        %v1354 = vsel %vm1353, %v1335, %v1352
        %v1355 = vsel %vm223, %v1347, %v1348
        %v1356 = vsel %vm1353, %v1337, %v1355
        %v1357 = vsel %vm223, %v1349, %v1350
        %v1358 = vsel %vm1353, %v1341, %v1357
        %v1359 = vsel %vm223, %v1350, %v1351
        %v1360 = vsel %vm1353, %v1343, %v1359
        %1365 = vst [vmem:[#allocation3 + $0x320] sm:$0xff] %v1354
        %1366 = vst [vmem:[#allocation3 + $0x328] sm:$0xff] %v1356
        %1367 = vst [vmem:[#allocation3 + $0x330] sm:$0xff] %v1358
        %1368 = vst [vmem:[#allocation3 + $0x338] sm:$0xff] %v1360
        %v1369 = vld [vmem:[#allocation2 + $0x4] sm:$0xff]
        %v1370 = vld [vmem:[#allocation2 + $0xc] sm:$0xff]
        %v1371 = vld [vmem:[#allocation2 + $0x14] sm:$0xf]
        %v1372 = vld [vmem:[#allocation2 + $0x1c] sm:$0xff]
        %v1373 = vld [vmem:[#allocation2 + $0x24] sm:$0xff]
        %v1374 = vld [vmem:[#allocation2 + $0x2c] sm:$0xf]
        %1381 = vrot.lane.b32.xlu0 %v1369, 34
        %v1382 = vpop.permute.xlu0 %1381
        %1383 = vrot.lane.b32.xlu0 %v1370, 34
        %v1384 = vpop.permute.xlu0 %1383
        %1385 = vrot.lane.b32.xlu0 %v1371, 34
        %v1386 = vpop.permute.xlu0 %1385
        %1387 = vrot.lane.b32.xlu0 %v1372, 34
        %v1388 = vpop.permute.xlu0 %1387
        %1389 = vrot.lane.b32.xlu0 %v1373, 34
        %v1390 = vpop.permute.xlu0 %1389
        %1391 = vrot.lane.b32.xlu0 %v1374, 34
        %v1392 = vpop.permute.xlu0 %1391
        %v1393 = vrot.slane %v1382, 4
        %v1394 = vrot.slane %v1384, 4
        %v1395 = vrot.slane %v1386, 4
        %v1396 = vrot.slane %v1388, 4
        %v1397 = vrot.slane %v1390, 4
        %v1398 = vrot.slane %v1392, 4
        %v1399 = vsel %vm223, %v1393, %v1394
        %vm1400 = vcmask 277504
        %v1401 = vsel %vm1400, %v1382, %v1399
        %v1402 = vsel %vm223, %v1394, %v1395
        %v1403 = vsel %vm1400, %v1384, %v1402
        %v1404 = vsel %vm223, %v1396, %v1397
        %v1405 = vsel %vm1400, %v1388, %v1404
        %v1406 = vsel %vm223, %v1397, %v1398
        %v1407 = vsel %vm1400, %v1390, %v1406
        %1412 = vst [vmem:[#allocation3 + $0x340] sm:$0xff] %v1401
        %1413 = vst [vmem:[#allocation3 + $0x348] sm:$0xff] %v1403
        %1414 = vst [vmem:[#allocation3 + $0x350] sm:$0xff] %v1405
        %1415 = vst [vmem:[#allocation3 + $0x358] sm:$0xff] %v1407
        %v1416 = vld [vmem:[%s1] sm:$0xff]
        %v1417 = vld [vmem:[%s1 + $0x8] sm:$0xff]
        %v1418 = vld [vmem:[%s1 + $0x10] sm:$0xff]
        %v1419 = vld [vmem:[%s1 + $0x18] sm:$0xff]
        %v1420 = vld [vmem:[%s1 + $0x20] sm:$0xff]
        %v1421 = vld [vmem:[%s1 + $0x28] sm:$0xff]
        %v1422 = vld [vmem:[%s1 + $0x30] sm:$0xff]
        %v1423 = vld [vmem:[%s1 + $0x38] sm:$0xff]
        %v1424 = vld [vmem:[%s1 + $0x40] sm:$0xff]
        %v1425 = vld [vmem:[%s1 + $0x48] sm:$0xff]
        %v1426 = vld [vmem:[%s1 + $0x50] sm:$0xff]
        %v1427 = vld [vmem:[%s1 + $0x58] sm:$0xff]
        %v1428 = vld [vmem:[%s1 + $0x60] sm:$0xff]
        %v1429 = vld [vmem:[%s1 + $0x68] sm:$0xff]
        %v1430 = vld [vmem:[%s1 + $0x70] sm:$0xff]
        %v1431 = vld [vmem:[%s1 + $0x78] sm:$0xff]
        %v1432 = vld [vmem:[#allocation3] sm:$0xff]
        %v1433 = vld [vmem:[#allocation3 + $0x8] sm:$0xff]
        %v1434 = vld [vmem:[#allocation3 + $0x10] sm:$0xff]
        %v1435 = vld [vmem:[#allocation3 + $0x18] sm:$0xff]
        %v1436 = vld [vmem:[#allocation3 + $0x20] sm:$0xff]
        %v1437 = vld [vmem:[#allocation3 + $0x28] sm:$0xff]
        %v1438 = vld [vmem:[#allocation3 + $0x30] sm:$0xff]
        %v1439 = vld [vmem:[#allocation3 + $0x38] sm:$0xff]
        %v1440 = vld [vmem:[#allocation3 + $0x40] sm:$0xff]
        %v1441 = vld [vmem:[#allocation3 + $0x48] sm:$0xff]
        %v1442 = vld [vmem:[#allocation3 + $0x50] sm:$0xff]
        %v1443 = vld [vmem:[#allocation3 + $0x58] sm:$0xff]
        %v1444 = vld [vmem:[#allocation3 + $0x60] sm:$0xff]
        %v1445 = vld [vmem:[#allocation3 + $0x68] sm:$0xff]
        %v1446 = vld [vmem:[#allocation3 + $0x70] sm:$0xff]
        %v1447 = vld [vmem:[#allocation3 + $0x78] sm:$0xff]
        %v1448 = vld [vmem:[#allocation3 + $0x80] sm:$0xff]
        %v1449 = vld [vmem:[#allocation3 + $0x88] sm:$0xff]
        %v1450 = vld [vmem:[#allocation3 + $0x90] sm:$0xff]
        %v1451 = vld [vmem:[#allocation3 + $0x98] sm:$0xff]
        %v1452 = vld [vmem:[#allocation3 + $0xa0] sm:$0xff]
        %v1453 = vld [vmem:[#allocation3 + $0xa8] sm:$0xff]
        %v1454 = vld [vmem:[#allocation3 + $0xb0] sm:$0xff]
        %v1455 = vld [vmem:[#allocation3 + $0xb8] sm:$0xff]
        %v1456 = vld [vmem:[#allocation3 + $0xc0] sm:$0xff]
        %v1457 = vld [vmem:[#allocation3 + $0xc8] sm:$0xff]
        %v1458 = vld [vmem:[#allocation3 + $0xd0] sm:$0xff]
        %v1459 = vld [vmem:[#allocation3 + $0xd8] sm:$0xff]
        %v1460 = vld [vmem:[#allocation3 + $0xe0] sm:$0xff]
        %v1461 = vld [vmem:[#allocation3 + $0xe8] sm:$0xff]
        %v1462 = vld [vmem:[#allocation3 + $0xf0] sm:$0xff]
        %v1463 = vld [vmem:[#allocation3 + $0xf8] sm:$0xff]
        %v1464 = vld [vmem:[#allocation3 + $0x100] sm:$0xff]
        %v1465 = vld [vmem:[#allocation3 + $0x108] sm:$0xff]
        %v1466 = vld [vmem:[#allocation3 + $0x110] sm:$0xff]
        %v1467 = vld [vmem:[#allocation3 + $0x118] sm:$0xff]
        %v1468 = vld [vmem:[#allocation3 + $0x120] sm:$0xff]
        %v1469 = vld [vmem:[#allocation3 + $0x128] sm:$0xff]
        %v1470 = vld [vmem:[#allocation3 + $0x130] sm:$0xff]
        %v1471 = vld [vmem:[#allocation3 + $0x138] sm:$0xff]
        %v1472 = vld [vmem:[#allocation3 + $0x140] sm:$0xff]
        %v1473 = vld [vmem:[#allocation3 + $0x148] sm:$0xff]
        %v1474 = vld [vmem:[#allocation3 + $0x150] sm:$0xff]
        %v1475 = vld [vmem:[#allocation3 + $0x158] sm:$0xff]
        %v1476 = vld [vmem:[#allocation3 + $0x160] sm:$0xff]
        %v1477 = vld [vmem:[#allocation3 + $0x168] sm:$0xff]
        %v1478 = vld [vmem:[#allocation3 + $0x170] sm:$0xff]
        %v1479 = vld [vmem:[#allocation3 + $0x178] sm:$0xff]
        %v1480 = vld [vmem:[#allocation3 + $0x180] sm:$0xff]
        %v1481 = vld [vmem:[#allocation3 + $0x188] sm:$0xff]
        %v1482 = vld [vmem:[#allocation3 + $0x190] sm:$0xff]
        %v1483 = vld [vmem:[#allocation3 + $0x198] sm:$0xff]
        %v1484 = vld [vmem:[#allocation3 + $0x1a0] sm:$0xff]
        %v1485 = vld [vmem:[#allocation3 + $0x1a8] sm:$0xff]
        %v1486 = vld [vmem:[#allocation3 + $0x1b0] sm:$0xff]
        %v1487 = vld [vmem:[#allocation3 + $0x1b8] sm:$0xff]
        %v1488 = vld [vmem:[#allocation3 + $0x1c0] sm:$0xff]
        %v1489 = vld [vmem:[#allocation3 + $0x1c8] sm:$0xff]
        %v1490 = vld [vmem:[#allocation3 + $0x1d0] sm:$0xff]
        %v1491 = vld [vmem:[#allocation3 + $0x1d8] sm:$0xff]
        %v1492 = vld [vmem:[#allocation3 + $0x1e0] sm:$0xff]
        %v1493 = vld [vmem:[#allocation3 + $0x1e8] sm:$0xff]
        %v1494 = vld [vmem:[#allocation3 + $0x1f0] sm:$0xff]
        %v1495 = vld [vmem:[#allocation3 + $0x1f8] sm:$0xff]
        %v1496 = vld [vmem:[#allocation3 + $0x200] sm:$0xff]
        %v1497 = vld [vmem:[#allocation3 + $0x208] sm:$0xff]
        %v1498 = vld [vmem:[#allocation3 + $0x210] sm:$0xff]
        %v1499 = vld [vmem:[#allocation3 + $0x218] sm:$0xff]
        %v1500 = vld [vmem:[#allocation3 + $0x220] sm:$0xff]
        %v1501 = vld [vmem:[#allocation3 + $0x228] sm:$0xff]
        %v1502 = vld [vmem:[#allocation3 + $0x230] sm:$0xff]
        %v1503 = vld [vmem:[#allocation3 + $0x238] sm:$0xff]
        %v1504 = vld [vmem:[#allocation3 + $0x240] sm:$0xff]
        %v1505 = vld [vmem:[#allocation3 + $0x248] sm:$0xff]
        %v1506 = vld [vmem:[#allocation3 + $0x250] sm:$0xff]
        %v1507 = vld [vmem:[#allocation3 + $0x258] sm:$0xff]
        %v1508 = vld [vmem:[#allocation3 + $0x260] sm:$0xff]
        %v1509 = vld [vmem:[#allocation3 + $0x268] sm:$0xff]
        %v1510 = vld [vmem:[#allocation3 + $0x270] sm:$0xff]
        %v1511 = vld [vmem:[#allocation3 + $0x278] sm:$0xff]
        %v1512 = vld [vmem:[#allocation3 + $0x280] sm:$0xff]
        %v1513 = vld [vmem:[#allocation3 + $0x288] sm:$0xff]
        %v1514 = vld [vmem:[#allocation3 + $0x290] sm:$0xff]
        %v1515 = vld [vmem:[#allocation3 + $0x298] sm:$0xff]
        %v1516 = vld [vmem:[#allocation3 + $0x2a0] sm:$0xff]
        %v1517 = vld [vmem:[#allocation3 + $0x2a8] sm:$0xff]
        %v1518 = vld [vmem:[#allocation3 + $0x2b0] sm:$0xff]
        %v1519 = vld [vmem:[#allocation3 + $0x2b8] sm:$0xff]
        %v1520 = vld [vmem:[#allocation3 + $0x2c0] sm:$0xff]
        %v1521 = vld [vmem:[#allocation3 + $0x2c8] sm:$0xff]
        %v1522 = vld [vmem:[#allocation3 + $0x2d0] sm:$0xff]
        %v1523 = vld [vmem:[#allocation3 + $0x2d8] sm:$0xff]
        %v1524 = vld [vmem:[#allocation3 + $0x2e0] sm:$0xff]
        %v1525 = vld [vmem:[#allocation3 + $0x2e8] sm:$0xff]
        %v1526 = vld [vmem:[#allocation3 + $0x2f0] sm:$0xff]
        %v1527 = vld [vmem:[#allocation3 + $0x2f8] sm:$0xff]
        %v1528 = vld [vmem:[#allocation3 + $0x300] sm:$0xff]
        %v1529 = vld [vmem:[#allocation3 + $0x308] sm:$0xff]
        %v1530 = vld [vmem:[#allocation3 + $0x310] sm:$0xff]
        %v1531 = vld [vmem:[#allocation3 + $0x318] sm:$0xff]
        %v1532 = vld [vmem:[#allocation3 + $0x320] sm:$0xff]
        %v1533 = vld [vmem:[#allocation3 + $0x328] sm:$0xff]
        %v1534 = vld [vmem:[#allocation3 + $0x330] sm:$0xff]
        %v1535 = vld [vmem:[#allocation3 + $0x338] sm:$0xff]
        %v1536 = vld [vmem:[#allocation3 + $0x340] sm:$0xff]
        %v1537 = vld [vmem:[#allocation3 + $0x348] sm:$0xff]
        %v1538 = vld [vmem:[#allocation3 + $0x350] sm:$0xff]
        %v1539 = vld [vmem:[#allocation3 + $0x358] sm:$0xff]
        %v1540 = vld [vmem:[%s2] sm:$0xff]
        %v1541 = vld [vmem:[%s2 + $0x8] sm:$0xff]
        %v1542 = vld [vmem:[%s2 + $0x10] sm:$0xff]
        %v1543 = vld [vmem:[%s2 + $0x18] sm:$0xff]
        %v1544 = vld [vmem:[%s2 + $0x20] sm:$0xff]
        %v1545 = vld [vmem:[%s2 + $0x28] sm:$0xff]
        %v1546 = vld [vmem:[%s2 + $0x30] sm:$0xff]
        %v1547 = vld [vmem:[%s2 + $0x38] sm:$0xff]
        %1549 = vset.pattern.permute.xlu0 0
        %1550 = vperm.xlu0 %1549, %v1540
        %v1551 = vpop.permute.xlu0 %1550
        %1554 = vset.pattern.permute.xlu0 0
        %1555 = vperm.xlu0 %1554, %v1541
        %v1556 = vpop.permute.xlu0 %1555
        %1559 = vset.pattern.permute.xlu0 0
        %1560 = vperm.xlu0 %1559, %v1542
        %v1561 = vpop.permute.xlu0 %1560
        %1564 = vset.pattern.permute.xlu0 0
        %1565 = vperm.xlu0 %1564, %v1543
        %v1566 = vpop.permute.xlu0 %1565
        %1569 = vset.pattern.permute.xlu0 0
        %1570 = vperm.xlu0 %1569, %v1544
        %v1571 = vpop.permute.xlu0 %1570
        %1574 = vset.pattern.permute.xlu0 0
        %1575 = vperm.xlu0 %1574, %v1545
        %v1576 = vpop.permute.xlu0 %1575
        %1579 = vset.pattern.permute.xlu0 0
        %1580 = vperm.xlu0 %1579, %v1546
        %v1581 = vpop.permute.xlu0 %1580
        %1584 = vset.pattern.permute.xlu0 0
        %1585 = vperm.xlu0 %1584, %v1547
        %v1586 = vpop.permute.xlu0 %1585
        %v1604 = vunpack.c.l.b16 %v1416
        %v1605 = vunpack.c.h.b16 %v1416
        %v1606 = vunpack.c.l.b16 %v1417
        %v1607 = vunpack.c.h.b16 %v1417
        %v1608 = vunpack.c.l.b16 %v1418
        %v1609 = vunpack.c.h.b16 %v1418
        %v1610 = vunpack.c.l.b16 %v1419
        %v1611 = vunpack.c.h.b16 %v1419
        %v1612 = vunpack.c.l.b16 %v1420
        %v1613 = vunpack.c.h.b16 %v1420
        %v1614 = vunpack.c.l.b16 %v1421
        %v1615 = vunpack.c.h.b16 %v1421
        %v1616 = vunpack.c.l.b16 %v1422
        %v1617 = vunpack.c.h.b16 %v1422
        %v1618 = vunpack.c.l.b16 %v1423
        %v1619 = vunpack.c.h.b16 %v1423
        %v1620 = vunpack.c.l.b16 %v1424
        %v1621 = vunpack.c.h.b16 %v1424
        %v1622 = vunpack.c.l.b16 %v1425
        %v1623 = vunpack.c.h.b16 %v1425
        %v1624 = vunpack.c.l.b16 %v1426
        %v1625 = vunpack.c.h.b16 %v1426
        %v1626 = vunpack.c.l.b16 %v1427
        %v1627 = vunpack.c.h.b16 %v1427
        %v1628 = vunpack.c.l.b16 %v1428
        %v1629 = vunpack.c.h.b16 %v1428
        %v1630 = vunpack.c.l.b16 %v1429
        %v1631 = vunpack.c.h.b16 %v1429
        %v1632 = vunpack.c.l.b16 %v1430
        %v1633 = vunpack.c.h.b16 %v1430
        %v1634 = vunpack.c.l.b16 %v1431
        %v1635 = vunpack.c.h.b16 %v1431
        %v1636 = vpack.c.b16 %v1608, %v1604
        %v1637 = vpack.c.b16 %v1609, %v1605
        %v1638 = vpack.c.b16 %v1610, %v1606
        %v1639 = vpack.c.b16 %v1611, %v1607
        %v1640 = vpack.c.b16 %v1616, %v1612
        %v1641 = vpack.c.b16 %v1617, %v1613
        %v1642 = vpack.c.b16 %v1618, %v1614
        %v1643 = vpack.c.b16 %v1619, %v1615
        %v1644 = vpack.c.b16 %v1624, %v1620
        %v1645 = vpack.c.b16 %v1625, %v1621
        %v1646 = vpack.c.b16 %v1626, %v1622
        %v1647 = vpack.c.b16 %v1627, %v1623
        %v1648 = vpack.c.b16 %v1632, %v1628
        %v1649 = vpack.c.b16 %v1633, %v1629
        %v1650 = vpack.c.b16 %v1634, %v1630
        %v1651 = vpack.c.b16 %v1635, %v1631
        %v1772 = vunpack.c.l.b16 %v1432
        %v1773 = vunpack.c.h.b16 %v1432
        %v1774 = vunpack.c.l.b16 %v1433
        %v1775 = vunpack.c.h.b16 %v1433
        %v1776 = vunpack.c.l.b16 %v1434
        %v1777 = vunpack.c.h.b16 %v1434
        %v1778 = vunpack.c.l.b16 %v1435
        %v1779 = vunpack.c.h.b16 %v1435
        %v1780 = vunpack.c.l.b16 %v1436
        %v1781 = vunpack.c.h.b16 %v1436
        %v1782 = vunpack.c.l.b16 %v1437
        %v1783 = vunpack.c.h.b16 %v1437
        %v1784 = vunpack.c.l.b16 %v1438
        %v1785 = vunpack.c.h.b16 %v1438
        %v1786 = vunpack.c.l.b16 %v1439
        %v1787 = vunpack.c.h.b16 %v1439
        %v1788 = vunpack.c.l.b16 %v1440
        %v1789 = vunpack.c.h.b16 %v1440
        %v1790 = vunpack.c.l.b16 %v1441
        %v1791 = vunpack.c.h.b16 %v1441
        %v1792 = vunpack.c.l.b16 %v1442
        %v1793 = vunpack.c.h.b16 %v1442
        %v1794 = vunpack.c.l.b16 %v1443
        %v1795 = vunpack.c.h.b16 %v1443
        %v1796 = vunpack.c.l.b16 %v1444
        %v1797 = vunpack.c.h.b16 %v1444
        %v1798 = vunpack.c.l.b16 %v1445
        %v1799 = vunpack.c.h.b16 %v1445
        %v1800 = vunpack.c.l.b16 %v1446
        %v1801 = vunpack.c.h.b16 %v1446
        %v1802 = vunpack.c.l.b16 %v1447
        %v1803 = vunpack.c.h.b16 %v1447
        %v1804 = vunpack.c.l.b16 %v1448
        %v1805 = vunpack.c.h.b16 %v1448
        %v1806 = vunpack.c.l.b16 %v1449
        %v1807 = vunpack.c.h.b16 %v1449
        %v1808 = vunpack.c.l.b16 %v1450
        %v1809 = vunpack.c.h.b16 %v1450
        %v1810 = vunpack.c.l.b16 %v1451
        %v1811 = vunpack.c.h.b16 %v1451
        %v1812 = vunpack.c.l.b16 %v1452
        %v1813 = vunpack.c.h.b16 %v1452
        %v1814 = vunpack.c.l.b16 %v1453
        %v1815 = vunpack.c.h.b16 %v1453
        %v1816 = vunpack.c.l.b16 %v1454
        %v1817 = vunpack.c.h.b16 %v1454
        %v1818 = vunpack.c.l.b16 %v1455
        %v1819 = vunpack.c.h.b16 %v1455
        %v1820 = vunpack.c.l.b16 %v1456
        %v1821 = vunpack.c.h.b16 %v1456
        %v1822 = vunpack.c.l.b16 %v1457
        %v1823 = vunpack.c.h.b16 %v1457
        %v1824 = vunpack.c.l.b16 %v1458
        %v1825 = vunpack.c.h.b16 %v1458
        %v1826 = vunpack.c.l.b16 %v1459
        %v1827 = vunpack.c.h.b16 %v1459
        %v1828 = vunpack.c.l.b16 %v1460
        %v1829 = vunpack.c.h.b16 %v1460
        %v1830 = vunpack.c.l.b16 %v1461
        %v1831 = vunpack.c.h.b16 %v1461
        %v1832 = vunpack.c.l.b16 %v1462
        %v1833 = vunpack.c.h.b16 %v1462
        %v1834 = vunpack.c.l.b16 %v1463
        %v1835 = vunpack.c.h.b16 %v1463
        %v1836 = vunpack.c.l.b16 %v1464
        %v1837 = vunpack.c.h.b16 %v1464
        %v1838 = vunpack.c.l.b16 %v1465
        %v1839 = vunpack.c.h.b16 %v1465
        %v1840 = vunpack.c.l.b16 %v1466
        %v1841 = vunpack.c.h.b16 %v1466
        %v1842 = vunpack.c.l.b16 %v1467
        %v1843 = vunpack.c.h.b16 %v1467
        %v1844 = vunpack.c.l.b16 %v1468
        %v1845 = vunpack.c.h.b16 %v1468
        %v1846 = vunpack.c.l.b16 %v1469
        %v1847 = vunpack.c.h.b16 %v1469
        %v1848 = vunpack.c.l.b16 %v1470
        %v1849 = vunpack.c.h.b16 %v1470
        %v1850 = vunpack.c.l.b16 %v1471
        %v1851 = vunpack.c.h.b16 %v1471
        %v1852 = vunpack.c.l.b16 %v1472
        %v1853 = vunpack.c.h.b16 %v1472
        %v1854 = vunpack.c.l.b16 %v1473
        %v1855 = vunpack.c.h.b16 %v1473
        %v1856 = vunpack.c.l.b16 %v1474
        %v1857 = vunpack.c.h.b16 %v1474
        %v1858 = vunpack.c.l.b16 %v1475
        %v1859 = vunpack.c.h.b16 %v1475
        %v1860 = vunpack.c.l.b16 %v1476
        %v1861 = vunpack.c.h.b16 %v1476
        %v1862 = vunpack.c.l.b16 %v1477
        %v1863 = vunpack.c.h.b16 %v1477
        %v1864 = vunpack.c.l.b16 %v1478
        %v1865 = vunpack.c.h.b16 %v1478
        %v1866 = vunpack.c.l.b16 %v1479
        %v1867 = vunpack.c.h.b16 %v1479
        %v1868 = vunpack.c.l.b16 %v1480
        %v1869 = vunpack.c.h.b16 %v1480
        %v1870 = vunpack.c.l.b16 %v1481
        %v1871 = vunpack.c.h.b16 %v1481
        %v1872 = vunpack.c.l.b16 %v1482
        %v1873 = vunpack.c.h.b16 %v1482
        %v1874 = vunpack.c.l.b16 %v1483
        %v1875 = vunpack.c.h.b16 %v1483
        %v1876 = vunpack.c.l.b16 %v1484
        %v1877 = vunpack.c.h.b16 %v1484
        %v1878 = vunpack.c.l.b16 %v1485
        %v1879 = vunpack.c.h.b16 %v1485
        %v1880 = vunpack.c.l.b16 %v1486
        %v1881 = vunpack.c.h.b16 %v1486
        %v1882 = vunpack.c.l.b16 %v1487
        %v1883 = vunpack.c.h.b16 %v1487
        %v1884 = vunpack.c.l.b16 %v1488
        %v1885 = vunpack.c.h.b16 %v1488
        %v1886 = vunpack.c.l.b16 %v1489
        %v1887 = vunpack.c.h.b16 %v1489
        %v1888 = vunpack.c.l.b16 %v1490
        %v1889 = vunpack.c.h.b16 %v1490
        %v1890 = vunpack.c.l.b16 %v1491
        %v1891 = vunpack.c.h.b16 %v1491
        %v1892 = vunpack.c.l.b16 %v1492
        %v1893 = vunpack.c.h.b16 %v1492
        %v1894 = vunpack.c.l.b16 %v1493
        %v1895 = vunpack.c.h.b16 %v1493
        %v1896 = vunpack.c.l.b16 %v1494
        %v1897 = vunpack.c.h.b16 %v1494
        %v1898 = vunpack.c.l.b16 %v1495
        %v1899 = vunpack.c.h.b16 %v1495
        %v1900 = vunpack.c.l.b16 %v1496
        %v1901 = vunpack.c.h.b16 %v1496
        %v1902 = vunpack.c.l.b16 %v1497
        %v1903 = vunpack.c.h.b16 %v1497
        %v1904 = vunpack.c.l.b16 %v1498
        %v1905 = vunpack.c.h.b16 %v1498
        %v1906 = vunpack.c.l.b16 %v1499
        %v1907 = vunpack.c.h.b16 %v1499
        %v1908 = vunpack.c.l.b16 %v1500
        %v1909 = vunpack.c.h.b16 %v1500
        %v1910 = vunpack.c.l.b16 %v1501
        %v1911 = vunpack.c.h.b16 %v1501
        %v1912 = vunpack.c.l.b16 %v1502
        %v1913 = vunpack.c.h.b16 %v1502
        %v1914 = vunpack.c.l.b16 %v1503
        %v1915 = vunpack.c.h.b16 %v1503
        %v1916 = vunpack.c.l.b16 %v1504
        %v1917 = vunpack.c.h.b16 %v1504
        %v1918 = vunpack.c.l.b16 %v1505
        %v1919 = vunpack.c.h.b16 %v1505
        %v1920 = vunpack.c.l.b16 %v1506
        %v1921 = vunpack.c.h.b16 %v1506
        %v1922 = vunpack.c.l.b16 %v1507
        %v1923 = vunpack.c.h.b16 %v1507
        %v1924 = vunpack.c.l.b16 %v1508
        %v1925 = vunpack.c.h.b16 %v1508
        %v1926 = vunpack.c.l.b16 %v1509
        %v1927 = vunpack.c.h.b16 %v1509
        %v1928 = vunpack.c.l.b16 %v1510
        %v1929 = vunpack.c.h.b16 %v1510
        %v1930 = vunpack.c.l.b16 %v1511
        %v1931 = vunpack.c.h.b16 %v1511
        %v1932 = vunpack.c.l.b16 %v1512
        %v1933 = vunpack.c.h.b16 %v1512
        %v1934 = vunpack.c.l.b16 %v1513
        %v1935 = vunpack.c.h.b16 %v1513
        %v1936 = vunpack.c.l.b16 %v1514
        %v1937 = vunpack.c.h.b16 %v1514
        %v1938 = vunpack.c.l.b16 %v1515
        %v1939 = vunpack.c.h.b16 %v1515
        %v1940 = vunpack.c.l.b16 %v1516
        %v1941 = vunpack.c.h.b16 %v1516
        %v1942 = vunpack.c.l.b16 %v1517
        %v1943 = vunpack.c.h.b16 %v1517
        %v1944 = vunpack.c.l.b16 %v1518
        %v1945 = vunpack.c.h.b16 %v1518
        %v1946 = vunpack.c.l.b16 %v1519
        %v1947 = vunpack.c.h.b16 %v1519
        %v1948 = vunpack.c.l.b16 %v1520
        %v1949 = vunpack.c.h.b16 %v1520
        %v1950 = vunpack.c.l.b16 %v1521
        %v1951 = vunpack.c.h.b16 %v1521
        %v1952 = vunpack.c.l.b16 %v1522
        %v1953 = vunpack.c.h.b16 %v1522
        %v1954 = vunpack.c.l.b16 %v1523
        %v1955 = vunpack.c.h.b16 %v1523
        %v1956 = vunpack.c.l.b16 %v1524
        %v1957 = vunpack.c.h.b16 %v1524
        %v1958 = vunpack.c.l.b16 %v1525
        %v1959 = vunpack.c.h.b16 %v1525
        %v1960 = vunpack.c.l.b16 %v1526
        %v1961 = vunpack.c.h.b16 %v1526
        %v1962 = vunpack.c.l.b16 %v1527
        %v1963 = vunpack.c.h.b16 %v1527
        %v1964 = vunpack.c.l.b16 %v1528
        %v1965 = vunpack.c.h.b16 %v1528
        %v1966 = vunpack.c.l.b16 %v1529
        %v1967 = vunpack.c.h.b16 %v1529
        %v1968 = vunpack.c.l.b16 %v1530
        %v1969 = vunpack.c.h.b16 %v1530
        %v1970 = vunpack.c.l.b16 %v1531
        %v1971 = vunpack.c.h.b16 %v1531
        %v1972 = vunpack.c.l.b16 %v1532
        %v1973 = vunpack.c.h.b16 %v1532
        %v1974 = vunpack.c.l.b16 %v1533
        %v1975 = vunpack.c.h.b16 %v1533
        %v1976 = vunpack.c.l.b16 %v1534
        %v1977 = vunpack.c.h.b16 %v1534
        %v1978 = vunpack.c.l.b16 %v1535
        %v1979 = vunpack.c.h.b16 %v1535
        %v1980 = vunpack.c.l.b16 %v1536
        %v1981 = vunpack.c.h.b16 %v1536
        %v1982 = vunpack.c.l.b16 %v1537
        %v1983 = vunpack.c.h.b16 %v1537
        %v1984 = vunpack.c.l.b16 %v1538
        %v1985 = vunpack.c.h.b16 %v1538
        %v1986 = vunpack.c.l.b16 %v1539
        %v1987 = vunpack.c.h.b16 %v1539
        %v1988 = vpack.c.b16 %v1776, %v1772
        %v1989 = vpack.c.b16 %v1777, %v1773
        %v1990 = vpack.c.b16 %v1778, %v1774
        %v1991 = vpack.c.b16 %v1779, %v1775
        %v1992 = vpack.c.b16 %v1784, %v1780
        %v1993 = vpack.c.b16 %v1785, %v1781
        %v1994 = vpack.c.b16 %v1786, %v1782
        %v1995 = vpack.c.b16 %v1787, %v1783
        %v1996 = vpack.c.b16 %v1792, %v1788
        %v1997 = vpack.c.b16 %v1793, %v1789
        %v1998 = vpack.c.b16 %v1794, %v1790
        %v1999 = vpack.c.b16 %v1795, %v1791
        %v2000 = vpack.c.b16 %v1800, %v1796
        %v2001 = vpack.c.b16 %v1801, %v1797
        %v2002 = vpack.c.b16 %v1802, %v1798
        %v2003 = vpack.c.b16 %v1803, %v1799
        %v2004 = vpack.c.b16 %v1808, %v1804
        %v2005 = vpack.c.b16 %v1809, %v1805
        %v2006 = vpack.c.b16 %v1810, %v1806
        %v2007 = vpack.c.b16 %v1811, %v1807
        %v2008 = vpack.c.b16 %v1816, %v1812
        %v2009 = vpack.c.b16 %v1817, %v1813
        %v2010 = vpack.c.b16 %v1818, %v1814
        %v2011 = vpack.c.b16 %v1819, %v1815
        %v2012 = vpack.c.b16 %v1824, %v1820
        %v2013 = vpack.c.b16 %v1825, %v1821
        %v2014 = vpack.c.b16 %v1826, %v1822
        %v2015 = vpack.c.b16 %v1827, %v1823
        %v2016 = vpack.c.b16 %v1832, %v1828
        %v2017 = vpack.c.b16 %v1833, %v1829
        %v2018 = vpack.c.b16 %v1834, %v1830
        %v2019 = vpack.c.b16 %v1835, %v1831
        %v2020 = vpack.c.b16 %v1840, %v1836
        %v2021 = vpack.c.b16 %v1841, %v1837
        %v2022 = vpack.c.b16 %v1842, %v1838
        %v2023 = vpack.c.b16 %v1843, %v1839
        %v2024 = vpack.c.b16 %v1848, %v1844
        %v2025 = vpack.c.b16 %v1849, %v1845
        %v2026 = vpack.c.b16 %v1850, %v1846
        %v2027 = vpack.c.b16 %v1851, %v1847
        %v2028 = vpack.c.b16 %v1856, %v1852
        %v2029 = vpack.c.b16 %v1857, %v1853
        %v2030 = vpack.c.b16 %v1858, %v1854
        %v2031 = vpack.c.b16 %v1859, %v1855
        %v2032 = vpack.c.b16 %v1864, %v1860
        %v2033 = vpack.c.b16 %v1865, %v1861
        %v2034 = vpack.c.b16 %v1866, %v1862
        %v2035 = vpack.c.b16 %v1867, %v1863
        %v2036 = vpack.c.b16 %v1872, %v1868
        %v2037 = vpack.c.b16 %v1873, %v1869
        %v2038 = vpack.c.b16 %v1874, %v1870
        %v2039 = vpack.c.b16 %v1875, %v1871
        %v2040 = vpack.c.b16 %v1880, %v1876
        %v2041 = vpack.c.b16 %v1881, %v1877
        %v2042 = vpack.c.b16 %v1882, %v1878
        %v2043 = vpack.c.b16 %v1883, %v1879
        %v2044 = vpack.c.b16 %v1888, %v1884
        %v2045 = vpack.c.b16 %v1889, %v1885
        %v2046 = vpack.c.b16 %v1890, %v1886
        %v2047 = vpack.c.b16 %v1891, %v1887
        %v2048 = vpack.c.b16 %v1896, %v1892
        %v2049 = vpack.c.b16 %v1897, %v1893
        %v2050 = vpack.c.b16 %v1898, %v1894
        %v2051 = vpack.c.b16 %v1899, %v1895
        %v2052 = vpack.c.b16 %v1904, %v1900
        %v2053 = vpack.c.b16 %v1905, %v1901
        %v2054 = vpack.c.b16 %v1906, %v1902
        %v2055 = vpack.c.b16 %v1907, %v1903
        %v2056 = vpack.c.b16 %v1912, %v1908
        %v2057 = vpack.c.b16 %v1913, %v1909
        %v2058 = vpack.c.b16 %v1914, %v1910
        %v2059 = vpack.c.b16 %v1915, %v1911
        %v2060 = vpack.c.b16 %v1920, %v1916
        %v2061 = vpack.c.b16 %v1921, %v1917
        %v2062 = vpack.c.b16 %v1922, %v1918
        %v2063 = vpack.c.b16 %v1923, %v1919
        %v2064 = vpack.c.b16 %v1928, %v1924
        %v2065 = vpack.c.b16 %v1929, %v1925
        %v2066 = vpack.c.b16 %v1930, %v1926
        %v2067 = vpack.c.b16 %v1931, %v1927
        %v2068 = vpack.c.b16 %v1936, %v1932
        %v2069 = vpack.c.b16 %v1937, %v1933
        %v2070 = vpack.c.b16 %v1938, %v1934
        %v2071 = vpack.c.b16 %v1939, %v1935
        %v2072 = vpack.c.b16 %v1944, %v1940
        %v2073 = vpack.c.b16 %v1945, %v1941
        %v2074 = vpack.c.b16 %v1946, %v1942
        %v2075 = vpack.c.b16 %v1947, %v1943
        %v2076 = vpack.c.b16 %v1952, %v1948
        %v2077 = vpack.c.b16 %v1953, %v1949
        %v2078 = vpack.c.b16 %v1954, %v1950
        %v2079 = vpack.c.b16 %v1955, %v1951
        %v2080 = vpack.c.b16 %v1960, %v1956
        %v2081 = vpack.c.b16 %v1961, %v1957
        %v2082 = vpack.c.b16 %v1962, %v1958
        %v2083 = vpack.c.b16 %v1963, %v1959
        %v2084 = vpack.c.b16 %v1968, %v1964
        %v2085 = vpack.c.b16 %v1969, %v1965
        %v2086 = vpack.c.b16 %v1970, %v1966
        %v2087 = vpack.c.b16 %v1971, %v1967
        %v2088 = vpack.c.b16 %v1976, %v1972
        %v2089 = vpack.c.b16 %v1977, %v1973
        %v2090 = vpack.c.b16 %v1978, %v1974
        %v2091 = vpack.c.b16 %v1979, %v1975
        %v2092 = vpack.c.b16 %v1984, %v1980
        %v2093 = vpack.c.b16 %v1985, %v1981
        %v2094 = vpack.c.b16 %v1986, %v1982
        %v2095 = vpack.c.b16 %v1987, %v1983
        %vm2204 = vcmask 392192
        %v2206 = vsel %vm2204, %v1639, 0
        %v2209 = vsel %vm2204, %v1643, 0
        %v2212 = vsel %vm2204, %v1647, 0
        %v2215 = vsel %vm2204, %v1651, 0
        %2217 = vmatprep.subr.bf16.mxu0 %v2017
        %2218 = vmatpush1.bf16.msra.mxu0 %v2016
        %2219 = vmatprep.subr.bf16.mxu0 %v2013
        %2220 = vmatpush1.bf16.msra.mxu0 %v2012
        %2221 = vmatprep.subr.bf16.mxu0 %v2009
        %2222 = vmatpush1.bf16.msra.mxu0 %v2008
        %2223 = vmatprep.subr.bf16.mxu0 %v2005
        %2224 = vmatpush1.bf16.msra.mxu0 %v2004
        %2225 = vmatprep.subr.bf16.mxu0 %v2001
        %2226 = vmatpush1.bf16.msra.mxu0 %v2000
        %2227 = vmatprep.subr.bf16.mxu0 %v1997
        %2228 = vmatpush1.bf16.msra.mxu0 %v1996
        %2229 = vmatprep.subr.bf16.mxu0 %v1993
        %2230 = vmatpush1.bf16.msra.mxu0 %v1992
        %2231 = vmatprep.subr.bf16.mxu0 %v1989
        %2232 = vmatpush1.bf16.msra.mxu0 %v1988
        %2233 = vmatprep.subr.bf16.mxu0 %v2049
        %2234 = vmatpush2.bf16.msra.mxu0 %v2048
        %2235 = vmatprep.subr.bf16.mxu0 %v2045
        %2236 = vmatpush2.bf16.msra.mxu0 %v2044
        %2237 = vmatprep.subr.bf16.mxu0 %v2041
        %2238 = vmatpush2.bf16.msra.mxu0 %v2040
        %2239 = vmatprep.subr.bf16.mxu0 %v2037
        %2240 = vmatpush2.bf16.msra.mxu0 %v2036
        %2241 = vmatprep.subr.bf16.mxu0 %v2033
        %2242 = vmatpush2.bf16.msra.mxu0 %v2032
        %2243 = vmatprep.subr.bf16.mxu0 %v2029
        %2244 = vmatpush2.bf16.msra.mxu0 %v2028
        %2245 = vmatprep.subr.bf16.mxu0 %v2025
        %2246 = vmatpush2.bf16.msra.mxu0 %v2024
        %2247 = vmatprep.subr.bf16.mxu0 %v2021
        %2248 = vmatpush2.bf16.msra.mxu0 %v2020
        %2249 = vmatprep.mubr.bf16.mxu0 %v1637
        %2250 = vmatmul.mubr.bf16.gmra.mxu0 %v1636
        %v2251 = vpop.f32.mrf.mxu0
        %v2252 = vadd.f32 %v1551, %v2251
        %v2253 = vpop.f32.mrf.mxu0
        %v2254 = vadd.f32 %v1551, %v2253
        %v2255 = vpop.f32.mrf.mxu0
        %v2256 = vadd.f32 %v1556, %v2255
        %v2257 = vpop.f32.mrf.mxu0
        %v2258 = vadd.f32 %v1556, %v2257
        %2259 = vmatprep.mubr.bf16.mxu0 %v1641
        %2260 = vmatmul.mubr.bf16.gmra.mxu0 %v1640
        %v2261 = vpop.f32.mrf.mxu0
        %v2262 = vadd.f32 %v1561, %v2261
        %v2263 = vpop.f32.mrf.mxu0
        %v2264 = vadd.f32 %v1561, %v2263
        %v2265 = vpop.f32.mrf.mxu0
        %v2266 = vadd.f32 %v1566, %v2265
        %v2267 = vpop.f32.mrf.mxu0
        %v2268 = vadd.f32 %v1566, %v2267
        %2269 = vmatprep.mubr.bf16.mxu0 %v1645
        %2270 = vmatmul.mubr.bf16.gmra.mxu0 %v1644
        %v2271 = vpop.f32.mrf.mxu0
        %v2272 = vadd.f32 %v1571, %v2271
        %v2273 = vpop.f32.mrf.mxu0
        %v2274 = vadd.f32 %v1571, %v2273
        %v2275 = vpop.f32.mrf.mxu0
        %v2276 = vadd.f32 %v1576, %v2275
        %v2277 = vpop.f32.mrf.mxu0
        %v2278 = vadd.f32 %v1576, %v2277
        %2279 = vmatprep.mubr.bf16.mxu0 %v1649
        %2280 = vmatmul.mubr.bf16.gmra.mxu0 %v1648
        %v2281 = vpop.f32.mrf.mxu0
        %v2282 = vadd.f32 %v1581, %v2281
        %v2283 = vpop.f32.mrf.mxu0
        %v2284 = vadd.f32 %v1581, %v2283
        %v2285 = vpop.f32.mrf.mxu0
        %v2286 = vadd.f32 %v1586, %v2285
        %v2287 = vpop.f32.mrf.mxu0
        %v2288 = vadd.f32 %v1586, %v2287
        %2289 = vdwg.mxu0
        %2290 = vmatprep.subr.bf16.mxu0 %v2081
        %2291 = vmatpush1.bf16.msra.mxu0 %v2080
        %2292 = vmatprep.subr.bf16.mxu0 %v2077
        %2293 = vmatpush1.bf16.msra.mxu0 %v2076
        %2294 = vmatprep.subr.bf16.mxu0 %v2073
        %2295 = vmatpush1.bf16.msra.mxu0 %v2072
        %2296 = vmatprep.subr.bf16.mxu0 %v2069
        %2297 = vmatpush1.bf16.msra.mxu0 %v2068
        %2298 = vmatprep.subr.bf16.mxu0 %v2065
        %2299 = vmatpush1.bf16.msra.mxu0 %v2064
        %2300 = vmatprep.subr.bf16.mxu0 %v2061
        %2301 = vmatpush1.bf16.msra.mxu0 %v2060
        %2302 = vmatprep.subr.bf16.mxu0 %v2057
        %2303 = vmatpush1.bf16.msra.mxu0 %v2056
        %2304 = vmatprep.subr.bf16.mxu0 %v2053
        %2305 = vmatpush1.bf16.msra.mxu0 %v2052
        %2306 = vmatprep.subr.bf16.mxu0 0
        %2307 = vmatpush2.bf16.msra.mxu0 0
        %2308 = vmatprep.subr.bf16.mxu0 0
        %2309 = vmatpush2.bf16.msra.mxu0 0
        %2310 = vmatprep.subr.bf16.mxu0 0
        %2311 = vmatpush2.bf16.msra.mxu0 0
        %2312 = vmatprep.subr.bf16.mxu0 0
        %2313 = vmatpush2.bf16.msra.mxu0 0
        %2314 = vmatprep.subr.bf16.mxu0 0
        %2315 = vmatpush2.bf16.msra.mxu0 0
        %2316 = vmatprep.subr.bf16.mxu0 %v2093
        %2317 = vmatpush2.bf16.msra.mxu0 %v2092
        %2318 = vmatprep.subr.bf16.mxu0 %v2089
        %2319 = vmatpush2.bf16.msra.mxu0 %v2088
        %2320 = vmatprep.subr.bf16.mxu0 %v2085
        %2321 = vmatpush2.bf16.msra.mxu0 %v2084
        %2322 = vmatprep.mubr.bf16.mxu0 %v2206
        %2323 = vmatmul.mubr.bf16.gmra.mxu0 %v1638
        %v2324 = vpop.f32.mrf.mxu0
        %v2325 = vadd.f32 %v2252, %v2324
        %v2326 = vpop.f32.mrf.mxu0
        %v2327 = vadd.f32 %v2254, %v2326
        %v2328 = vpop.f32.mrf.mxu0
        %v2329 = vadd.f32 %v2256, %v2328
        %v2330 = vpop.f32.mrf.mxu0
        %v2331 = vadd.f32 %v2258, %v2330
        %2332 = vmatprep.mubr.bf16.mxu0 %v2209
        %2333 = vmatmul.mubr.bf16.gmra.mxu0 %v1642
        %v2334 = vpop.f32.mrf.mxu0
        %v2335 = vadd.f32 %v2262, %v2334
        %v2336 = vpop.f32.mrf.mxu0
        %v2337 = vadd.f32 %v2264, %v2336
        %v2338 = vpop.f32.mrf.mxu0
        %v2339 = vadd.f32 %v2266, %v2338
        %v2340 = vpop.f32.mrf.mxu0
        %v2341 = vadd.f32 %v2268, %v2340
        %2342 = vmatprep.mubr.bf16.mxu0 %v2212
        %2343 = vmatmul.mubr.bf16.gmra.mxu0 %v1646
        %v2344 = vpop.f32.mrf.mxu0
        %v2345 = vadd.f32 %v2272, %v2344
        %v2346 = vpop.f32.mrf.mxu0
        %v2347 = vadd.f32 %v2274, %v2346
        %v2348 = vpop.f32.mrf.mxu0
        %v2349 = vadd.f32 %v2276, %v2348
        %v2350 = vpop.f32.mrf.mxu0
        %v2351 = vadd.f32 %v2278, %v2350
        %2352 = vmatprep.mubr.bf16.mxu0 %v2215
        %2353 = vmatmul.mubr.bf16.gmra.mxu0 %v1650
        %v2354 = vpop.f32.mrf.mxu0
        %v2355 = vadd.f32 %v2282, %v2354
        %v2356 = vpop.f32.mrf.mxu0
        %v2357 = vadd.f32 %v2284, %v2356
        %v2358 = vpop.f32.mrf.mxu0
        %v2359 = vadd.f32 %v2286, %v2358
        %v2360 = vpop.f32.mrf.mxu0
        %v2361 = vadd.f32 %v2288, %v2360
        %2362 = vdwg.mxu0
        %2363 = vmatprep.subr.bf16.mxu0 %v2019
        %2364 = vmatpush1.bf16.msra.mxu0 %v2018
        %2365 = vmatprep.subr.bf16.mxu0 %v2015
        %2366 = vmatpush1.bf16.msra.mxu0 %v2014
        %2367 = vmatprep.subr.bf16.mxu0 %v2011
        %2368 = vmatpush1.bf16.msra.mxu0 %v2010
        %2369 = vmatprep.subr.bf16.mxu0 %v2007
        %2370 = vmatpush1.bf16.msra.mxu0 %v2006
        %2371 = vmatprep.subr.bf16.mxu0 %v2003
        %2372 = vmatpush1.bf16.msra.mxu0 %v2002
        %2373 = vmatprep.subr.bf16.mxu0 %v1999
        %2374 = vmatpush1.bf16.msra.mxu0 %v1998
        %2375 = vmatprep.subr.bf16.mxu0 %v1995
        %2376 = vmatpush1.bf16.msra.mxu0 %v1994
        %2377 = vmatprep.subr.bf16.mxu0 %v1991
        %2378 = vmatpush1.bf16.msra.mxu0 %v1990
        %2379 = vmatprep.subr.bf16.mxu0 %v2051
        %2380 = vmatpush2.bf16.msra.mxu0 %v2050
        %2381 = vmatprep.subr.bf16.mxu0 %v2047
        %2382 = vmatpush2.bf16.msra.mxu0 %v2046
        %2383 = vmatprep.subr.bf16.mxu0 %v2043
        %2384 = vmatpush2.bf16.msra.mxu0 %v2042
        %2385 = vmatprep.subr.bf16.mxu0 %v2039
        %2386 = vmatpush2.bf16.msra.mxu0 %v2038
        %2387 = vmatprep.subr.bf16.mxu0 %v2035
        %2388 = vmatpush2.bf16.msra.mxu0 %v2034
        %2389 = vmatprep.subr.bf16.mxu0 %v2031
        %2390 = vmatpush2.bf16.msra.mxu0 %v2030
        %2391 = vmatprep.subr.bf16.mxu0 %v2027
        %2392 = vmatpush2.bf16.msra.mxu0 %v2026
        %2393 = vmatprep.subr.bf16.mxu0 %v2023
        %2394 = vmatpush2.bf16.msra.mxu0 %v2022
        %2395 = vmatprep.mubr.bf16.mxu0 %v1637
        %2396 = vmatmul.mubr.bf16.gmra.mxu0 %v1636
        %v2397 = vpop.f32.mrf.mxu0
        %v2398 = vadd.f32 %v1551, %v2397
        %v2399 = vpop.f32.mrf.mxu0
        %v2400 = vadd.f32 %v1551, %v2399
        %v2401 = vpop.f32.mrf.mxu0
        %v2402 = vadd.f32 %v1556, %v2401
        %v2403 = vpop.f32.mrf.mxu0
        %v2404 = vadd.f32 %v1556, %v2403
        %2405 = vmatprep.mubr.bf16.mxu0 %v1641
        %2406 = vmatmul.mubr.bf16.gmra.mxu0 %v1640
        %v2407 = vpop.f32.mrf.mxu0
        %v2408 = vadd.f32 %v1561, %v2407
        %v2409 = vpop.f32.mrf.mxu0
        %v2410 = vadd.f32 %v1561, %v2409
        %v2411 = vpop.f32.mrf.mxu0
        %v2412 = vadd.f32 %v1566, %v2411
        %v2413 = vpop.f32.mrf.mxu0
        %v2414 = vadd.f32 %v1566, %v2413
        %2415 = vmatprep.mubr.bf16.mxu0 %v1645
        %2416 = vmatmul.mubr.bf16.gmra.mxu0 %v1644
        %v2417 = vpop.f32.mrf.mxu0
        %v2418 = vadd.f32 %v1571, %v2417
        %v2419 = vpop.f32.mrf.mxu0
        %v2420 = vadd.f32 %v1571, %v2419
        %v2421 = vpop.f32.mrf.mxu0
        %v2422 = vadd.f32 %v1576, %v2421
        %v2423 = vpop.f32.mrf.mxu0
        %v2424 = vadd.f32 %v1576, %v2423
        %2425 = vmatprep.mubr.bf16.mxu0 %v1649
        %2426 = vmatmul.mubr.bf16.gmra.mxu0 %v1648
        %v2427 = vpop.f32.mrf.mxu0
        %v2428 = vadd.f32 %v1581, %v2427
        %v2429 = vpop.f32.mrf.mxu0
        %v2430 = vadd.f32 %v1581, %v2429
        %v2431 = vpop.f32.mrf.mxu0
        %v2432 = vadd.f32 %v1586, %v2431
        %v2433 = vpop.f32.mrf.mxu0
        %v2434 = vadd.f32 %v1586, %v2433
        %2435 = vdwg.mxu0
        %2436 = vmatprep.subr.bf16.mxu0 %v2083
        %2437 = vmatpush1.bf16.msra.mxu0 %v2082
        %2438 = vmatprep.subr.bf16.mxu0 %v2079
        %2439 = vmatpush1.bf16.msra.mxu0 %v2078
        %2440 = vmatprep.subr.bf16.mxu0 %v2075
        %2441 = vmatpush1.bf16.msra.mxu0 %v2074
        %2442 = vmatprep.subr.bf16.mxu0 %v2071
        %2443 = vmatpush1.bf16.msra.mxu0 %v2070
        %2444 = vmatprep.subr.bf16.mxu0 %v2067
        %2445 = vmatpush1.bf16.msra.mxu0 %v2066
        %2446 = vmatprep.subr.bf16.mxu0 %v2063
        %2447 = vmatpush1.bf16.msra.mxu0 %v2062
        %2448 = vmatprep.subr.bf16.mxu0 %v2059
        %2449 = vmatpush1.bf16.msra.mxu0 %v2058
        %2450 = vmatprep.subr.bf16.mxu0 %v2055
        %2451 = vmatpush1.bf16.msra.mxu0 %v2054
        %2452 = vmatprep.subr.bf16.mxu0 0
        %2453 = vmatpush2.bf16.msra.mxu0 0
        %2454 = vmatprep.subr.bf16.mxu0 0
        %2455 = vmatpush2.bf16.msra.mxu0 0
        %2456 = vmatprep.subr.bf16.mxu0 0
        %2457 = vmatpush2.bf16.msra.mxu0 0
        %2458 = vmatprep.subr.bf16.mxu0 0
        %2459 = vmatpush2.bf16.msra.mxu0 0
        %2460 = vmatprep.subr.bf16.mxu0 0
        %2461 = vmatpush2.bf16.msra.mxu0 0
        %2462 = vmatprep.subr.bf16.mxu0 %v2095
        %2463 = vmatpush2.bf16.msra.mxu0 %v2094
        %2464 = vmatprep.subr.bf16.mxu0 %v2091
        %2465 = vmatpush2.bf16.msra.mxu0 %v2090
        %2466 = vmatprep.subr.bf16.mxu0 %v2087
        %2467 = vmatpush2.bf16.msra.mxu0 %v2086
        %2468 = vmatprep.mubr.bf16.mxu0 %v2206
        %2469 = vmatmul.mubr.bf16.gmra.mxu0 %v1638
        %v2470 = vpop.f32.mrf.mxu0
        %v2471 = vadd.f32 %v2398, %v2470
        %v2472 = vpop.f32.mrf.mxu0
        %v2473 = vadd.f32 %v2400, %v2472
        %v2474 = vpop.f32.mrf.mxu0
        %v2475 = vadd.f32 %v2402, %v2474
        %v2476 = vpop.f32.mrf.mxu0
        %v2477 = vadd.f32 %v2404, %v2476
        %2478 = vmatprep.mubr.bf16.mxu0 %v2209
        %2479 = vmatmul.mubr.bf16.gmra.mxu0 %v1642
        %v2480 = vpop.f32.mrf.mxu0
        %v2481 = vadd.f32 %v2408, %v2480
        %v2482 = vpop.f32.mrf.mxu0
        %v2483 = vadd.f32 %v2410, %v2482
        %v2484 = vpop.f32.mrf.mxu0
        %v2485 = vadd.f32 %v2412, %v2484
        %v2486 = vpop.f32.mrf.mxu0
        %v2487 = vadd.f32 %v2414, %v2486
        %2488 = vmatprep.mubr.bf16.mxu0 %v2212
        %2489 = vmatmul.mubr.bf16.gmra.mxu0 %v1646
        %v2490 = vpop.f32.mrf.mxu0
        %v2491 = vadd.f32 %v2418, %v2490
        %v2492 = vpop.f32.mrf.mxu0
        %v2493 = vadd.f32 %v2420, %v2492
        %v2494 = vpop.f32.mrf.mxu0
        %v2495 = vadd.f32 %v2422, %v2494
        %v2496 = vpop.f32.mrf.mxu0
        %v2497 = vadd.f32 %v2424, %v2496
        %2498 = vmatprep.mubr.bf16.mxu0 %v2215
        %2499 = vmatmul.mubr.bf16.gmra.mxu0 %v1650
        %v2500 = vpop.f32.mrf.mxu0
        %v2501 = vadd.f32 %v2428, %v2500
        %v2502 = vpop.f32.mrf.mxu0
        %v2503 = vadd.f32 %v2430, %v2502
        %v2504 = vpop.f32.mrf.mxu0
        %v2505 = vadd.f32 %v2432, %v2504
        %v2506 = vpop.f32.mrf.mxu0
        %v2507 = vadd.f32 %v2434, %v2506
        %2508 = vdwg.mxu0
        %v2509 = vmax.f32 %v2325, 0.0
        %v2510 = vmax.f32 %v2327, 0.0
        %v2511 = vmax.f32 %v2471, 0.0
        %v2512 = vmax.f32 %v2473, 0.0
        %v2513 = vmax.f32 %v2329, 0.0
        %v2514 = vmax.f32 %v2331, 0.0
        %v2515 = vmax.f32 %v2475, 0.0
        %v2516 = vmax.f32 %v2477, 0.0
        %v2517 = vmax.f32 %v2335, 0.0
        %v2518 = vmax.f32 %v2337, 0.0
        %v2519 = vmax.f32 %v2481, 0.0
        %v2520 = vmax.f32 %v2483, 0.0
        %v2521 = vmax.f32 %v2339, 0.0
        %v2522 = vmax.f32 %v2341, 0.0
        %v2523 = vmax.f32 %v2485, 0.0
        %v2524 = vmax.f32 %v2487, 0.0
        %v2525 = vmax.f32 %v2345, 0.0
        %v2526 = vmax.f32 %v2347, 0.0
        %v2527 = vmax.f32 %v2491, 0.0
        %v2528 = vmax.f32 %v2493, 0.0
        %v2529 = vmax.f32 %v2349, 0.0
        %v2530 = vmax.f32 %v2351, 0.0
        %v2531 = vmax.f32 %v2495, 0.0
        %v2532 = vmax.f32 %v2497, 0.0
        %v2533 = vmax.f32 %v2355, 0.0
        %v2534 = vmax.f32 %v2357, 0.0
        %v2535 = vmax.f32 %v2501, 0.0
        %v2536 = vmax.f32 %v2503, 0.0
        %v2537 = vmax.f32 %v2359, 0.0
        %v2538 = vmax.f32 %v2361, 0.0
        %v2539 = vmax.f32 %v2505, 0.0
        %v2540 = vmax.f32 %v2507, 0.0
        %2541 = vst [vmem:[%s118] sm:$0xff] %v2509
        %2542 = vst [vmem:[%s118 + $0x8] sm:$0xff] %v2510
        %2543 = vst [vmem:[%s118 + $0x10] sm:$0xff] %v2511
        %2544 = vst [vmem:[%s118 + $0x18] sm:$0xff] %v2512
        %2545 = vst [vmem:[%s118 + $0x20] sm:$0xff] %v2513
        %2546 = vst [vmem:[%s118 + $0x28] sm:$0xff] %v2514
        %2547 = vst [vmem:[%s118 + $0x30] sm:$0xff] %v2515
        %2548 = vst [vmem:[%s118 + $0x38] sm:$0xff] %v2516
        %2549 = vst [vmem:[%s118 + $0x40] sm:$0xff] %v2517
        %2550 = vst [vmem:[%s118 + $0x48] sm:$0xff] %v2518
        %2551 = vst [vmem:[%s118 + $0x50] sm:$0xff] %v2519
        %2552 = vst [vmem:[%s118 + $0x58] sm:$0xff] %v2520
        %2553 = vst [vmem:[%s118 + $0x60] sm:$0xff] %v2521
        %2554 = vst [vmem:[%s118 + $0x68] sm:$0xff] %v2522
        %2555 = vst [vmem:[%s118 + $0x70] sm:$0xff] %v2523
        %2556 = vst [vmem:[%s118 + $0x78] sm:$0xff] %v2524
        %2557 = vst [vmem:[%s118 + $0x80] sm:$0xff] %v2525
        %2558 = vst [vmem:[%s118 + $0x88] sm:$0xff] %v2526
        %2559 = vst [vmem:[%s118 + $0x90] sm:$0xff] %v2527
        %2560 = vst [vmem:[%s118 + $0x98] sm:$0xff] %v2528
        %2561 = vst [vmem:[%s118 + $0xa0] sm:$0xff] %v2529
        %2562 = vst [vmem:[%s118 + $0xa8] sm:$0xff] %v2530
        %2563 = vst [vmem:[%s118 + $0xb0] sm:$0xff] %v2531
        %2564 = vst [vmem:[%s118 + $0xb8] sm:$0xff] %v2532
        %2565 = vst [vmem:[%s118 + $0xc0] sm:$0xff] %v2533
        %2566 = vst [vmem:[%s118 + $0xc8] sm:$0xff] %v2534
        %2567 = vst [vmem:[%s118 + $0xd0] sm:$0xff] %v2535
        %2568 = vst [vmem:[%s118 + $0xd8] sm:$0xff] %v2536
        %2569 = vst [vmem:[%s118 + $0xe0] sm:$0xff] %v2537
        %2570 = vst [vmem:[%s118 + $0xe8] sm:$0xff] %v2538
        %2571 = vst [vmem:[%s118 + $0xf0] sm:$0xff] %v2539
        %2572 = vst [vmem:[%s118 + $0xf8] sm:$0xff] %v2540
        %s2573 = sand.u32 %s64, 1
        %s2574 = sand.u32 %s64, 1
        %s2575 = smul.addr %s2574, 256
        %s2576 = scalar_lea.vmem [#allocation5], %s2575
        // Predicated region
        $region63: #{deconv3d_block_forward.1} parent=27 // pred_check
          %p2577 = pneg %p74
        $region64: #{deconv3d_block_forward.1} parent=27 // pred_check_branch
          %2579 = sbr.rel (%p2577) target = $region66
        $region65: #{deconv3d_block_forward.1} parent=27 // pred_region
          %s2580 = smul.u32 4, %s14
          %s2581 = smul.addr %s2580, 8
          %s2582 = scalar_lea.vmem %s3, %s2581
          // Predicated region
          $region67: #{deconv3d_block_forward.1} parent=65 // pred_check
            _
          $region68: #{deconv3d_block_forward.1} parent=65 // pred_check_branch
            %2584 = sbr.rel (0) target = $region70
          $region69: #{deconv3d_block_forward.1} parent=65 // pred_region
            // Predicated region
            $region71: #{deconv3d_block_forward.1} parent=69 // pred_check
              _
            $region72: #{deconv3d_block_forward.1} parent=69 // pred_check_branch
              %2586 = sbr.rel (0) target = $region74
            $region73: #{deconv3d_block_forward.1} parent=69 // pred_region
              loop: start=0, step=1, limit=1
              $region75: #{deconv3d_block_forward.1} parent=73 // loop_pre_header
                _
              $region76: #{deconv3d_block_forward.1} parent=73 // loop_header
                %s2588 = sphi 0, %s2592
                %p2589 = scmp.ge.s32.totalorder %s2588, 1
                %s2593 = sphi %s2576, %s2576
                %s2594 = sphi %s2582, %s2582
              $region77: #{deconv3d_block_forward.1} parent=73 // loop_header_branch
                %2591 = sbr.rel (%p2589) target = $region81
              $region78: #{deconv3d_block_forward.1} parent=73 // loop_body
                %v2595 = vld [vmem:[%s2593] sm:$0xff]
                %2596 = vst [vmem:[%s2594] sm:$0xff] %v2595
                %v2597 = vld [vmem:[%s2593 + $0x8] sm:$0xff]
                %2598 = vst [vmem:[%s2594 + $0x8] sm:$0xff] %v2597
                %v2599 = vld [vmem:[%s2593 + $0x10] sm:$0xff]
                %2600 = vst [vmem:[%s2594 + $0x10] sm:$0xff] %v2599
                %v2601 = vld [vmem:[%s2593 + $0x18] sm:$0xff]
                %2602 = vst [vmem:[%s2594 + $0x18] sm:$0xff] %v2601
                %v2603 = vld [vmem:[%s2593 + $0x20] sm:$0xff]
                %2604 = vst [vmem:[%s2594 + $0x80] sm:$0xff] %v2603
                %v2605 = vld [vmem:[%s2593 + $0x28] sm:$0xff]
                %2606 = vst [vmem:[%s2594 + $0x88] sm:$0xff] %v2605
                %v2607 = vld [vmem:[%s2593 + $0x30] sm:$0xff]
                %2608 = vst [vmem:[%s2594 + $0x90] sm:$0xff] %v2607
                %v2609 = vld [vmem:[%s2593 + $0x38] sm:$0xff]
                %2610 = vst [vmem:[%s2594 + $0x98] sm:$0xff] %v2609
                %v2611 = vld [vmem:[%s2593 + $0x40] sm:$0xff]
                %2612 = vst [vmem:[%s2594 + $0x100] sm:$0xff] %v2611
                %v2613 = vld [vmem:[%s2593 + $0x48] sm:$0xff]
                %2614 = vst [vmem:[%s2594 + $0x108] sm:$0xff] %v2613
                %v2615 = vld [vmem:[%s2593 + $0x50] sm:$0xff]
                %2616 = vst [vmem:[%s2594 + $0x110] sm:$0xff] %v2615
                %v2617 = vld [vmem:[%s2593 + $0x58] sm:$0xff]
                %2618 = vst [vmem:[%s2594 + $0x118] sm:$0xff] %v2617
                %v2619 = vld [vmem:[%s2593 + $0x60] sm:$0xff]
                %2620 = vst [vmem:[%s2594 + $0x180] sm:$0xff] %v2619
                %v2621 = vld [vmem:[%s2593 + $0x68] sm:$0xff]
                %2622 = vst [vmem:[%s2594 + $0x188] sm:$0xff] %v2621
                %v2623 = vld [vmem:[%s2593 + $0x70] sm:$0xff]
                %2624 = vst [vmem:[%s2594 + $0x190] sm:$0xff] %v2623
                %v2625 = vld [vmem:[%s2593 + $0x78] sm:$0xff]
                %2626 = vst [vmem:[%s2594 + $0x198] sm:$0xff] %v2625
                %v2627 = vld [vmem:[%s2593 + $0x80] sm:$0xff]
                %2628 = vst [vmem:[%s2594 + $0x200] sm:$0xff] %v2627
                %v2629 = vld [vmem:[%s2593 + $0x88] sm:$0xff]
                %2630 = vst [vmem:[%s2594 + $0x208] sm:$0xff] %v2629
                %v2631 = vld [vmem:[%s2593 + $0x90] sm:$0xff]
                %2632 = vst [vmem:[%s2594 + $0x210] sm:$0xff] %v2631
                %v2633 = vld [vmem:[%s2593 + $0x98] sm:$0xff]
                %2634 = vst [vmem:[%s2594 + $0x218] sm:$0xff] %v2633
                %v2635 = vld [vmem:[%s2593 + $0xa0] sm:$0xff]
                %2636 = vst [vmem:[%s2594 + $0x280] sm:$0xff] %v2635
                %v2637 = vld [vmem:[%s2593 + $0xa8] sm:$0xff]
                %2638 = vst [vmem:[%s2594 + $0x288] sm:$0xff] %v2637
                %v2639 = vld [vmem:[%s2593 + $0xb0] sm:$0xff]
                %2640 = vst [vmem:[%s2594 + $0x290] sm:$0xff] %v2639
                %v2641 = vld [vmem:[%s2593 + $0xb8] sm:$0xff]
                %2642 = vst [vmem:[%s2594 + $0x298] sm:$0xff] %v2641
                %v2643 = vld [vmem:[%s2593 + $0xc0] sm:$0xff]
                %2644 = vst [vmem:[%s2594 + $0x300] sm:$0xff] %v2643
                %v2645 = vld [vmem:[%s2593 + $0xc8] sm:$0xff]
                %2646 = vst [vmem:[%s2594 + $0x308] sm:$0xff] %v2645
                %v2647 = vld [vmem:[%s2593 + $0xd0] sm:$0xff]
                %2648 = vst [vmem:[%s2594 + $0x310] sm:$0xff] %v2647
                %v2649 = vld [vmem:[%s2593 + $0xd8] sm:$0xff]
                %2650 = vst [vmem:[%s2594 + $0x318] sm:$0xff] %v2649
                %v2651 = vld [vmem:[%s2593 + $0xe0] sm:$0xff]
                %2652 = vst [vmem:[%s2594 + $0x380] sm:$0xff] %v2651
                %v2653 = vld [vmem:[%s2593 + $0xe8] sm:$0xff]
                %2654 = vst [vmem:[%s2594 + $0x388] sm:$0xff] %v2653
                %v2655 = vld [vmem:[%s2593 + $0xf0] sm:$0xff]
                %2656 = vst [vmem:[%s2594 + $0x390] sm:$0xff] %v2655
                %v2657 = vld [vmem:[%s2593 + $0xf8] sm:$0xff]
                %2658 = vst [vmem:[%s2594 + $0x398] sm:$0xff] %v2657
              $region79: #{deconv3d_block_forward.1} parent=73 // loop_footer
                %s2592 = sadd.s32 1, %s2588
              $region80: #{deconv3d_block_forward.1} parent=73 // loop_footer_branch
                %2587 = sbr.rel target = $region76
              $region81: #{deconv3d_block_forward.1} parent=73 // loop_exit
                _
            $region74: #{deconv3d_block_forward.1} parent=69 // pred_fallthru
              _
            // Predicated region
            $region82: #{deconv3d_block_forward.1} parent=69 // pred_check
              _
            $region83: #{deconv3d_block_forward.1} parent=69 // pred_check_branch
              %2660 = sbr.rel target = $region85
            $region84: #{deconv3d_block_forward.1} parent=69 // pred_region
              _
            $region85: #{deconv3d_block_forward.1} parent=69 // pred_fallthru
              _
          $region70: #{deconv3d_block_forward.1} parent=65 // pred_fallthru
            _
          %2661 = vnop
        $region66: #{deconv3d_block_forward.1} parent=27 // pred_fallthru
          _
      $region28: #{deconv3d_block_forward.1} parent=5 // pred_fallthru
        _
      %p2662 = scmp.le.s32.totalorder 2, %s9
      // Predicated region
      $region86: #{deconv3d_block_forward.1} parent=5 // pred_check
        %p2663 = pneg %p2662
      $region87: #{deconv3d_block_forward.1} parent=5 // pred_check_branch
        %2665 = sbr.rel (%p2663) target = $region89
      $region88: #{deconv3d_block_forward.1} parent=5 // pred_region
        %s2666 = ssub.s32 %s9, 2
        // Predicated region
        $region90: #{deconv3d_block_forward.1} parent=88 // pred_check
          %p2667 = pneg %p80
        $region91: #{deconv3d_block_forward.1} parent=88 // pred_check_branch
          %2669 = sbr.rel (%p2667) target = $region93
        $region92: #{deconv3d_block_forward.1} parent=88 // pred_region
          %s2670 = sand.u32 %s65, 1
          %s2671 = sand.u32 %s65, 1
          %s2672 = smul.addr %s2671, 256
          %s2673 = scalar_lea.vmem [#allocation5], %s2672
        $region93: #{deconv3d_block_forward.1} parent=88 // pred_fallthru
          _
      $region89: #{deconv3d_block_forward.1} parent=5 // pred_fallthru
        _
    $region6: #{deconv3d_block_forward.1} parent=1 // loop_footer
      %s13 = sadd.s32 1, %s9
    $region7: #{deconv3d_block_forward.1} parent=1 // loop_footer_branch
      %8 = sbr.rel target = $region3
    $region8: #{deconv3d_block_forward.1} parent=1 // loop_exit
      _
  %2674 = vsyncmov [#allocation4]
  %s2675 = vpop.sfrf %2674
  %p2676 = scmp.eq.s32.totalorder %s2675, 0
  %p2677 = pneg %p2676
  %2679 = shalt.err (%p2677)

</llo_original>
